<compile_context>
chip_gen: v5e
topology: v5e:2x2
jax: 0.10.0
libtpu: 0.0.40
codegen_flags: <defaults>
</compile_context>

<pallas_src>
import functools

import jax
import jax.numpy as jnp
from jax.experimental import pallas as pl
from jax.experimental.pallas import tpu as pltpu


LANE = 128
_VMEM_LIMIT = 32 * 1024 * 1024   # explicit scoped-VMEM limit: safe on v7x (64 MiB phys) and v5e/v6e
_TILE_BUDGET = 20 * 1024 * 1024  # per-grid-step working-set target (leaves pipelining headroom)


def _round_up(x, m):
    return ((x + m - 1) // m) * m


# ----------------------------- Pallas kernels ------------------------------- #
def _gemm_stats_kernel(p_ref, w_ref, y_ref, s_ref):
    """Pass 1: conv-as-GEMM (bf16 on the MXU, f32 acc) + per-tile channel stats.

    p_ref: (TILE_N, K)      bf16 im2col patches tile
    w_ref: (K, Coutp)       bf16 weights (VMEM-resident across the grid)
    y_ref: (TILE_N, Coutp)  f32 conv output tile
    s_ref: (1, 2, Coutp)    f32 [sum, sum-of-squares] over this tile's rows
    """
    acc = jnp.dot(p_ref[...], w_ref[...], preferred_element_type=jnp.float32)
    y_ref[...] = acc
    s_ref[0, 0:1, :] = jnp.sum(acc, axis=0, keepdims=True)
    s_ref[0, 1:2, :] = jnp.sum(acc * acc, axis=0, keepdims=True)


def _bn_relu_kernel(y_ref, scale_ref, shift_ref, o_ref):
    """Pass 2: lean epilogue y * scale + shift, ReLU (BN folded into scale/shift)."""
    o_ref[...] = jnp.maximum(
        y_ref[...] * scale_ref[...] + shift_ref[...], 0.0
    ).astype(o_ref.dtype)


# ------------------------------- JAX glue ----------------------------------- #
def _im2col_3x3(parts):
    """3x3 / pad=1 patches of channel-concat(parts), without materializing the concat.

    Channel order inside each tap follows the order of `parts`, i.e. the
    torch.cat(dim=1) order, which matches w_hwio.reshape(9*Cin, Cout).
    """
    # TODO(synk): build the patches in-kernel from a halo-row VMEM tile (manual
    # DMA) to cut the 9x im2col HBM traffic; kept as JAX layout glue here for
    # Mosaic-lowering robustness.
    B, H, W, _ = parts[0].shape
    padded = [jnp.pad(p, ((0, 0), (1, 1), (1, 1), (0, 0))) for p in parts]
    taps = []
    for dy in range(3):
        for dx in range(3):
            for p in padded:
                taps.append(p[:, dy:dy + H, dx:dx + W, :])
    patches = jnp.concatenate(taps, axis=-1)          # (B, H, W, 9*Cin)
    return patches.reshape(B * H * W, -1)


def _pick_tile_n(n_rows, k, coutp):
    """Largest row tile whose double-buffered working set fits the VMEM budget."""
    cap = max(LANE, _round_up(n_rows, LANE))
    resident = 2 * (k * coutp * 2) + 4 * (2 * coutp * 4)       # weights + stats buffers
    for cand in (2048, 1024, 512, 256, 128):
        if cand > cap:
            continue
        per_step = 2 * (cand * k * 2) + 2 * (cand * coutp * 4)  # patches(bf16) + y(f32), x2 bufs
        if per_step + resident <= _TILE_BUDGET:
            return cand
    return 128


def conv3x3_bn_relu(parts, w_hwio, gamma, beta, *, eps=1e-5, out_dtype=jnp.float32):
    """Conv2d(k=3, pad=1) -> BatchNorm2d(batch stats) -> ReLU, hot path in Pallas.

    `parts` is a list of NHWC tensors whose channel concatenation is the conv
    input. The conv bias is omitted: with batch-statistic BatchNorm directly
    after the conv, a per-channel bias cancels exactly in (x - mean).
    """
    B, H, W, _ = parts[0].shape
    cin = sum(int(p.shape[-1]) for p in parts)
    cout = int(w_hwio.shape[-1])
    k = 9 * cin
    coutp = _round_up(cout, LANE)                      # lane-dense output channels
    n = B * H * W

    tile_n = _pick_tile_n(n, k, coutp)
    n_pad = _round_up(n, tile_n)
    num_tiles = n_pad // tile_n

    patches = _im2col_3x3(parts).astype(jnp.bfloat16)  # (n, k), bf16 feeds the MXU
    if n_pad != n:
        # Zero rows contribute exactly 0 to sum / sum-of-squares (no bias is
        # added in pass 1), so batch statistics stay those of the real n rows.
        patches = jnp.pad(patches, ((0, n_pad - n), (0, 0)))

    w2d = w_hwio.reshape(k, cout).astype(jnp.bfloat16)
    w2d = jnp.pad(w2d, ((0, 0), (0, coutp - cout)))

    cparams = pltpu.CompilerParams(
        dimension_semantics=("parallel",),
        vmem_limit_bytes=_VMEM_LIMIT,
    )

    gemm_cost = pl.CostEstimate(
        flops=2 * n_pad * k * coutp,
        transcendentals=0,
        bytes_accessed=(n_pad * k * 2 + k * coutp * 2
                        + n_pad * coutp * 4 + num_tiles * 2 * coutp * 4),
    )
    y, stats = pl.pallas_call(
        _gemm_stats_kernel,
        out_shape=(
            jax.ShapeDtypeStruct((n_pad, coutp), jnp.float32),
            jax.ShapeDtypeStruct((num_tiles, 2, coutp), jnp.float32),
        ),
        grid=(num_tiles,),
        in_specs=[
            pl.BlockSpec((tile_n, k), lambda i: (i, 0)),
            pl.BlockSpec((k, coutp), lambda i: (0, 0)),      # weights stay resident
        ],
        out_specs=(
            pl.BlockSpec((tile_n, coutp), lambda i: (i, 0)),
            pl.BlockSpec((1, 2, coutp), lambda i: (i, 0, 0)),
        ),
        compiler_params=cparams,
        cost_estimate=gemm_cost,
    )(patches, w2d)

    # Global (B, H, W) batch statistics (training-mode nn.BatchNorm2d, biased
    # variance), folded with gamma/beta into one per-channel scale/shift.
    sums = jnp.sum(stats, axis=0)                      # (2, coutp)
    mean = sums[0] / n
    var = sums[1] / n - mean * mean
    inv = jax.lax.rsqrt(var + eps)
    gamma_p = jnp.pad(gamma.astype(jnp.float32), (0, coutp - cout))
    beta_p = jnp.pad(beta.astype(jnp.float32), (0, coutp - cout))
    scale = (gamma_p * inv).reshape(1, coutp)
    shift = (beta_p - mean * gamma_p * inv).reshape(1, coutp)

    bn_cost = pl.CostEstimate(
        flops=3 * n_pad * coutp,
        transcendentals=0,
        bytes_accessed=(n_pad * coutp * 4 + 2 * coutp * 4
                        + n_pad * coutp * jnp.dtype(out_dtype).itemsize),
    )
    out = pl.pallas_call(
        _bn_relu_kernel,
        out_shape=jax.ShapeDtypeStruct((n_pad, coutp), out_dtype),
        grid=(num_tiles,),
        in_specs=[
            pl.BlockSpec((tile_n, coutp), lambda i: (i, 0)),
            pl.BlockSpec((1, coutp), lambda i: (0, 0)),
            pl.BlockSpec((1, coutp), lambda i: (0, 0)),
        ],
        out_specs=pl.BlockSpec((tile_n, coutp), lambda i: (i, 0)),
        compiler_params=cparams,
        cost_estimate=bn_cost,
    )(y, scale, shift)

    return out[:n, :cout].reshape(B, H, W, cout)


def _bilinear_upsample_x2_align_corners(x):
    """(B, H, W, C) -> (B, 2H, 2W, C); matches nn.Upsample(2, 'bilinear', True)."""
    B, H, W, C = x.shape
    Ho, Wo = 2 * H, 2 * W

    def src(n_in, n_out):
        if n_out <= 1 or n_in <= 1:
            return jnp.zeros((n_out,), jnp.float32)
        return jnp.arange(n_out, dtype=jnp.float32) * ((n_in - 1) / (n_out - 1))

    ys, xs = src(H, Ho), src(W, Wo)
    y0 = jnp.floor(ys).astype(jnp.int32)
    y1 = jnp.minimum(y0 + 1, H - 1)
    wy = (ys - y0.astype(jnp.float32))[None, :, None, None]
    x0 = jnp.floor(xs).astype(jnp.int32)
    x1 = jnp.minimum(x0 + 1, W - 1)
    wx = (xs - x0.astype(jnp.float32))[None, None, :, None]

    rows = x[:, y0] * (1.0 - wy) + x[:, y1] * wy      # (B, Ho, W, C)
    out = rows[:, :, x0] * (1.0 - wx) + rows[:, :, x1] * wx
    return out


def up_forward(params, x1_nchw, x2_nchw):
    """Equivalent of Up.forward(x1, x2) with bilinear=True (NCHW in / NCHW out)."""
    x1 = jnp.transpose(x1_nchw, (0, 2, 3, 1)).astype(jnp.float32)
    x2 = jnp.transpose(x2_nchw, (0, 2, 3, 1)).astype(jnp.float32)

    x1 = _bilinear_upsample_x2_align_corners(x1)

    diffY = x2.shape[1] - x1.shape[1]
    diffX = x2.shape[2] - x1.shape[2]
    x1 = jnp.pad(x1, ((0, 0),
                      (diffY // 2, diffY - diffY // 2),
                      (diffX // 2, diffX - diffX // 2),
                      (0, 0)))

    # torch.cat([x2, x1], dim=1) is fused into the im2col of the first conv.
    # Conv biases (params["b*"]) are mathematically a no-op in front of
    # batch-statistic BatchNorm and are therefore not used by the kernels.
    h = conv3x3_bn_relu([x2, x1], params["w1"], params["g1"], params["bt1"],
                        out_dtype=jnp.bfloat16)   # bf16: feeds the next GEMM directly
    h = conv3x3_bn_relu([h], params["w2"], params["g2"], params["bt2"],
                        out_dtype=jnp.float32)
    return jnp.transpose(h, (0, 3, 1, 2))


def init_params(key, in_channels, out_channels):
    """Deterministic synthetic parameters for DoubleConv(in_channels, out_channels)."""
    ks = jax.random.split(key, 8)

    def nrm(k, shape, scale=0.1):
        return scale * jax.random.normal(k, shape, jnp.float32)

    return {
        # conv1: HWIO (3, 3, in_channels, out_channels)
        "w1": nrm(ks[0], (3, 3, in_channels, out_channels)),
        "b1": nrm(ks[1], (out_channels,)),        # unused: cancels under batch-stat BN
        "g1": 1.0 + nrm(ks[2], (out_channels,)),
        "bt1": nrm(ks[3], (out_channels,)),
        # conv2: HWIO (3, 3, out_channels, out_channels)
        "w2": nrm(ks[4], (3, 3, out_channels, out_channels)),
        "b2": nrm(ks[5], (out_channels,)),        # unused: cancels under batch-stat BN
        "g2": 1.0 + nrm(ks[6], (out_channels,)),
        "bt2": nrm(ks[7], (out_channels,)),
    }


if __name__ == "__main__":
    key = jax.random.PRNGKey(0)
    k1, k2, kp = jax.random.split(key, 3)

    in_channels, out_channels = 8, 4
    # x1: coarse decoder features (B, in_channels//2, 8, 8)
    # x2: skip-connection features (B, in_channels//2, 16, 16)
    x1 = jax.random.normal(k1, (2, in_channels // 2, 8, 8), jnp.float32)
    x2 = jax.random.normal(k2, (2, in_channels // 2, 16, 16), jnp.float32)

    params = init_params(kp, in_channels, out_channels)

    out = jax.jit(functools.partial(up_forward, params))(x1, x2)
    out = jax.block_until_ready(out)
    assert out.shape == (2, out_channels, 16, 16), out.shape
    assert bool(jnp.all(jnp.isfinite(out)))
    print("KERNEL_OK")
</pallas_src>

<mosaic_0001>
module attributes {stable_mosaic.version = 11 : i64} {
  func.func @_gemm_stats_kernel(%arg0: i32, %arg1: memref<512x72xbf16, #tpu.memory_space<vmem>>, %arg2: memref<72x128xbf16, #tpu.memory_space<vmem>>, %arg3: memref<512x128xf32, #tpu.memory_space<vmem>>, %arg4: memref<1x2x128xf32, #tpu.memory_space<vmem>>) attributes {dimension_semantics = [#tpu.dimension_semantics<parallel>], iteration_bounds = array<i64: 1>, scalar_prefetch = 0 : i64, scratch_operands = 0 : i64, tpu.core_type = #tpu.core_type<tc>, window_params = [{transform_indices = @transform_0, window_bounds = array<i64: 512, 72>}, {pipeline_mode = #tpu.pipeline_mode<synchronous>, transform_indices = @transform_1, window_bounds = array<i64: 72, 128>}, {transform_indices = @transform_2, window_bounds = array<i64: 512, 128>}, {transform_indices = @transform_3, window_bounds = array<i64: 1, 2, 128>}]} {
    %c0 = arith.constant 0 : index
    %c0_0 = arith.constant 0 : index
    %0 = vector.load %arg1[%c0, %c0_0] : memref<512x72xbf16, #tpu.memory_space<vmem>>, vector<512x72xbf16>
    %c0_1 = arith.constant 0 : index
    %c0_2 = arith.constant 0 : index
    %1 = vector.load %arg2[%c0_1, %c0_2] : memref<72x128xbf16, #tpu.memory_space<vmem>>, vector<72x128xbf16>
    %cst = arith.constant dense<0.000000e+00> : vector<512x128xf32>
    %2 = tpu.matmul %0, %1, %cst {dimension_numbers = #tpu.dot_dimension_numbers<[1], [0], [0], [1], [0, 0, 1, 1], [], []>} : vector<512x72xbf16>, vector<72x128xbf16>, vector<512x128xf32> -> vector<512x128xf32>
    %c0_3 = arith.constant 0 : index
    %c0_4 = arith.constant 0 : index
    %3 = vector.load %arg3[%c0_3, %c0_4] : memref<512x128xf32, #tpu.memory_space<vmem>>, vector<512x128xf32>
    tpu.vector_store %arg3[%c0_3, %c0_4], %2 {strides = array<i32>} : memref<512x128xf32, #tpu.memory_space<vmem>>, vector<512x128xf32>,
    %cst_5 = arith.constant dense<0.000000e+00> : vector<128xf32>
    %4 = vector.multi_reduction <add>, %2, %cst_5 [0] : vector<512x128xf32> to vector<128xf32>
    %5 = vector.shape_cast %4 : vector<128xf32> to vector<1x128xf32>
    %c0_6 = arith.constant 0 : index
    %c0_7 = arith.constant 0 : index
    %c0_8 = arith.constant 0 : index
    %6 = vector.load %arg4[%c0_6, %c0_7, %c0_8] : memref<1x2x128xf32, #tpu.memory_space<vmem>>, vector<1x1x128xf32>
    %7 = vector.shape_cast %6 : vector<1x1x128xf32> to vector<1x128xf32>
    %8 = vector.shape_cast %5 : vector<1x128xf32> to vector<1x1x128xf32>
    tpu.vector_store %arg4[%c0_6, %c0_7, %c0_8], %8 {strides = array<i32>} : memref<1x2x128xf32, #tpu.memory_space<vmem>>, vector<1x1x128xf32>,
    %9 = arith.mulf %2, %2 : vector<512x128xf32>
    %cst_9 = arith.constant dense<0.000000e+00> : vector<128xf32>
    %10 = vector.multi_reduction <add>, %9, %cst_9 [0] : vector<512x128xf32> to vector<128xf32>
    %11 = vector.shape_cast %10 : vector<128xf32> to vector<1x128xf32>
    %c0_10 = arith.constant 0 : index
    %c1 = arith.constant 1 : index
    %c0_11 = arith.constant 0 : index
    %12 = vector.load %arg4[%c0_10, %c1, %c0_11] : memref<1x2x128xf32, #tpu.memory_space<vmem>>, vector<1x1x128xf32>
    %13 = vector.shape_cast %12 : vector<1x1x128xf32> to vector<1x128xf32>
    %14 = vector.shape_cast %11 : vector<1x128xf32> to vector<1x1x128xf32>
    tpu.vector_store %arg4[%c0_10, %c1, %c0_11], %14 {strides = array<i32>} : memref<1x2x128xf32, #tpu.memory_space<vmem>>, vector<1x1x128xf32>,
    return
  }
  func.func @transform_0(%arg0: i32) -> (i32, i32) {
    %c0_i32 = arith.constant 0 : i32
    %c0_i32_0 = arith.constant 0 : i32
    return %arg0, %c0_i32 : i32, i32
  }
  func.func @transform_1(%arg0: i32) -> (i32, i32) {
    %c0_i32 = arith.constant 0 : i32
    %c0_i32_0 = arith.constant 0 : i32
    %c0_i32_1 = arith.constant 0 : i32
    return %c0_i32, %c0_i32_0 : i32, i32
  }
  func.func @transform_2(%arg0: i32) -> (i32, i32) {
    %c0_i32 = arith.constant 0 : i32
    %c0_i32_0 = arith.constant 0 : i32
    return %arg0, %c0_i32 : i32, i32
  }
  func.func @transform_3(%arg0: i32) -> (i32, i32, i32) {
    %c0_i32 = arith.constant 0 : i32
    %c0_i32_0 = arith.constant 0 : i32
    %c0_i32_1 = arith.constant 0 : i32
    return %arg0, %c0_i32, %c0_i32_0 : i32, i32, i32
  }
}

module attributes {stable_mosaic.version = 11 : i64} {
  func.func @_bn_relu_kernel(%arg0: i32, %arg1: memref<512x128xf32, #tpu.memory_space<vmem>>, %arg2: memref<1x128xf32, #tpu.memory_space<vmem>>, %arg3: memref<1x128xf32, #tpu.memory_space<vmem>>, %arg4: memref<512x128xbf16, #tpu.memory_space<vmem>>) attributes {dimension_semantics = [#tpu.dimension_semantics<parallel>], iteration_bounds = array<i64: 1>, scalar_prefetch = 0 : i64, scratch_operands = 0 : i64, tpu.core_type = #tpu.core_type<tc>, window_params = [{transform_indices = @transform_0, window_bounds = array<i64: 512, 128>}, {pipeline_mode = #tpu.pipeline_mode<synchronous>, transform_indices = @transform_1, window_bounds = array<i64: 1, 128>}, {pipeline_mode = #tpu.pipeline_mode<synchronous>, transform_indices = @transform_2, window_bounds = array<i64: 1, 128>}, {transform_indices = @transform_3, window_bounds = array<i64: 512, 128>}]} {
    %c0 = arith.constant 0 : index
    %c0_0 = arith.constant 0 : index
    %0 = vector.load %arg1[%c0, %c0_0] : memref<512x128xf32, #tpu.memory_space<vmem>>, vector<512x128xf32>
    %c0_1 = arith.constant 0 : index
    %c0_2 = arith.constant 0 : index
    %1 = vector.load %arg2[%c0_1, %c0_2] : memref<1x128xf32, #tpu.memory_space<vmem>>, vector<1x128xf32>
    %2 = vector.broadcast %1 : vector<1x128xf32> to vector<512x128xf32>
    %3 = arith.mulf %0, %2 : vector<512x128xf32>
    %c0_3 = arith.constant 0 : index
    %c0_4 = arith.constant 0 : index
    %4 = vector.load %arg3[%c0_3, %c0_4] : memref<1x128xf32, #tpu.memory_space<vmem>>, vector<1x128xf32>
    %5 = vector.broadcast %4 : vector<1x128xf32> to vector<512x128xf32>
    %6 = arith.addf %3, %5 : vector<512x128xf32>
    %cst = arith.constant 0.000000e+00 : f32
    %7 = vector.broadcast %cst : f32 to vector<512x128xf32>
    %8 = arith.maximumf %6, %7 : vector<512x128xf32>
    %9 = arith.truncf %8 : vector<512x128xf32> to vector<512x128xbf16>
    %c0_5 = arith.constant 0 : index
    %c0_6 = arith.constant 0 : index
    %10 = vector.load %arg4[%c0_5, %c0_6] : memref<512x128xbf16, #tpu.memory_space<vmem>>, vector<512x128xbf16>
    tpu.vector_store %arg4[%c0_5, %c0_6], %9 {strides = array<i32>} : memref<512x128xbf16, #tpu.memory_space<vmem>>, vector<512x128xbf16>,
    return
  }
  func.func @transform_0(%arg0: i32) -> (i32, i32) {
    %c0_i32 = arith.constant 0 : i32
    %c0_i32_0 = arith.constant 0 : i32
    return %arg0, %c0_i32 : i32, i32
  }
  func.func @transform_1(%arg0: i32) -> (i32, i32) {
    %c0_i32 = arith.constant 0 : i32
    %c0_i32_0 = arith.constant 0 : i32
    %c0_i32_1 = arith.constant 0 : i32
    return %c0_i32, %c0_i32_0 : i32, i32
  }
  func.func @transform_2(%arg0: i32) -> (i32, i32) {
    %c0_i32 = arith.constant 0 : i32
    %c0_i32_0 = arith.constant 0 : i32
    %c0_i32_1 = arith.constant 0 : i32
    return %c0_i32, %c0_i32_0 : i32, i32
  }
  func.func @transform_3(%arg0: i32) -> (i32, i32) {
    %c0_i32 = arith.constant 0 : i32
    %c0_i32_0 = arith.constant 0 : i32
    return %arg0, %c0_i32 : i32, i32
  }
}

module attributes {stable_mosaic.version = 11 : i64} {
  func.func @_gemm_stats_kernel(%arg0: i32, %arg1: memref<512x36xbf16, #tpu.memory_space<vmem>>, %arg2: memref<36x128xbf16, #tpu.memory_space<vmem>>, %arg3: memref<512x128xf32, #tpu.memory_space<vmem>>, %arg4: memref<1x2x128xf32, #tpu.memory_space<vmem>>) attributes {dimension_semantics = [#tpu.dimension_semantics<parallel>], iteration_bounds = array<i64: 1>, scalar_prefetch = 0 : i64, scratch_operands = 0 : i64, tpu.core_type = #tpu.core_type<tc>, window_params = [{transform_indices = @transform_0, window_bounds = array<i64: 512, 36>}, {pipeline_mode = #tpu.pipeline_mode<synchronous>, transform_indices = @transform_1, window_bounds = array<i64: 36, 128>}, {transform_indices = @transform_2, window_bounds = array<i64: 512, 128>}, {transform_indices = @transform_3, window_bounds = array<i64: 1, 2, 128>}]} {
    %c0 = arith.constant 0 : index
    %c0_0 = arith.constant 0 : index
    %0 = vector.load %arg1[%c0, %c0_0] : memref<512x36xbf16, #tpu.memory_space<vmem>>, vector<512x36xbf16>
    %c0_1 = arith.constant 0 : index
    %c0_2 = arith.constant 0 : index
    %1 = vector.load %arg2[%c0_1, %c0_2] : memref<36x128xbf16, #tpu.memory_space<vmem>>, vector<36x128xbf16>
    %cst = arith.constant dense<0.000000e+00> : vector<512x128xf32>
    %2 = tpu.matmul %0, %1, %cst {dimension_numbers = #tpu.dot_dimension_numbers<[1], [0], [0], [1], [0, 0, 1, 1], [], []>} : vector<512x36xbf16>, vector<36x128xbf16>, vector<512x128xf32> -> vector<512x128xf32>
    %c0_3 = arith.constant 0 : index
    %c0_4 = arith.constant 0 : index
    %3 = vector.load %arg3[%c0_3, %c0_4] : memref<512x128xf32, #tpu.memory_space<vmem>>, vector<512x128xf32>
    tpu.vector_store %arg3[%c0_3, %c0_4], %2 {strides = array<i32>} : memref<512x128xf32, #tpu.memory_space<vmem>>, vector<512x128xf32>,
    %cst_5 = arith.constant dense<0.000000e+00> : vector<128xf32>
    %4 = vector.multi_reduction <add>, %2, %cst_5 [0] : vector<512x128xf32> to vector<128xf32>
    %5 = vector.shape_cast %4 : vector<128xf32> to vector<1x128xf32>
    %c0_6 = arith.constant 0 : index
    %c0_7 = arith.constant 0 : index
    %c0_8 = arith.constant 0 : index
    %6 = vector.load %arg4[%c0_6, %c0_7, %c0_8] : memref<1x2x128xf32, #tpu.memory_space<vmem>>, vector<1x1x128xf32>
    %7 = vector.shape_cast %6 : vector<1x1x128xf32> to vector<1x128xf32>
    %8 = vector.shape_cast %5 : vector<1x128xf32> to vector<1x1x128xf32>
    tpu.vector_store %arg4[%c0_6, %c0_7, %c0_8], %8 {strides = array<i32>} : memref<1x2x128xf32, #tpu.memory_space<vmem>>, vector<1x1x128xf32>,
    %9 = arith.mulf %2, %2 : vector<512x128xf32>
    %cst_9 = arith.constant dense<0.000000e+00> : vector<128xf32>
    %10 = vector.multi_reduction <add>, %9, %cst_9 [0] : vector<512x128xf32> to vector<128xf32>
    %11 = vector.shape_cast %10 : vector<128xf32> to vector<1x128xf32>
    %c0_10 = arith.constant 0 : index
    %c1 = arith.constant 1 : index
    %c0_11 = arith.constant 0 : index
    %12 = vector.load %arg4[%c0_10, %c1, %c0_11] : memref<1x2x128xf32, #tpu.memory_space<vmem>>, vector<1x1x128xf32>
    %13 = vector.shape_cast %12 : vector<1x1x128xf32> to vector<1x128xf32>
    %14 = vector.shape_cast %11 : vector<1x128xf32> to vector<1x1x128xf32>
    tpu.vector_store %arg4[%c0_10, %c1, %c0_11], %14 {strides = array<i32>} : memref<1x2x128xf32, #tpu.memory_space<vmem>>, vector<1x1x128xf32>,
    return
  }
  func.func @transform_0(%arg0: i32) -> (i32, i32) {
    %c0_i32 = arith.constant 0 : i32
    %c0_i32_0 = arith.constant 0 : i32
    return %arg0, %c0_i32 : i32, i32
  }
  func.func @transform_1(%arg0: i32) -> (i32, i32) {
    %c0_i32 = arith.constant 0 : i32
    %c0_i32_0 = arith.constant 0 : i32
    %c0_i32_1 = arith.constant 0 : i32
    return %c0_i32, %c0_i32_0 : i32, i32
  }
  func.func @transform_2(%arg0: i32) -> (i32, i32) {
    %c0_i32 = arith.constant 0 : i32
    %c0_i32_0 = arith.constant 0 : i32
    return %arg0, %c0_i32 : i32, i32
  }
  func.func @transform_3(%arg0: i32) -> (i32, i32, i32) {
    %c0_i32 = arith.constant 0 : i32
    %c0_i32_0 = arith.constant 0 : i32
    %c0_i32_1 = arith.constant 0 : i32
    return %arg0, %c0_i32, %c0_i32_0 : i32, i32, i32
  }
}

module attributes {stable_mosaic.version = 11 : i64} {
  func.func @_bn_relu_kernel(%arg0: i32, %arg1: memref<512x128xf32, #tpu.memory_space<vmem>>, %arg2: memref<1x128xf32, #tpu.memory_space<vmem>>, %arg3: memref<1x128xf32, #tpu.memory_space<vmem>>, %arg4: memref<512x128xf32, #tpu.memory_space<vmem>>) attributes {dimension_semantics = [#tpu.dimension_semantics<parallel>], iteration_bounds = array<i64: 1>, scalar_prefetch = 0 : i64, scratch_operands = 0 : i64, tpu.core_type = #tpu.core_type<tc>, window_params = [{transform_indices = @transform_0, window_bounds = array<i64: 512, 128>}, {pipeline_mode = #tpu.pipeline_mode<synchronous>, transform_indices = @transform_1, window_bounds = array<i64: 1, 128>}, {pipeline_mode = #tpu.pipeline_mode<synchronous>, transform_indices = @transform_2, window_bounds = array<i64: 1, 128>}, {transform_indices = @transform_3, window_bounds = array<i64: 512, 128>}]} {
    %c0 = arith.constant 0 : index
    %c0_0 = arith.constant 0 : index
    %0 = vector.load %arg1[%c0, %c0_0] : memref<512x128xf32, #tpu.memory_space<vmem>>, vector<512x128xf32>
    %c0_1 = arith.constant 0 : index
    %c0_2 = arith.constant 0 : index
    %1 = vector.load %arg2[%c0_1, %c0_2] : memref<1x128xf32, #tpu.memory_space<vmem>>, vector<1x128xf32>
    %2 = vector.broadcast %1 : vector<1x128xf32> to vector<512x128xf32>
    %3 = arith.mulf %0, %2 : vector<512x128xf32>
    %c0_3 = arith.constant 0 : index
    %c0_4 = arith.constant 0 : index
    %4 = vector.load %arg3[%c0_3, %c0_4] : memref<1x128xf32, #tpu.memory_space<vmem>>, vector<1x128xf32>
    %5 = vector.broadcast %4 : vector<1x128xf32> to vector<512x128xf32>
    %6 = arith.addf %3, %5 : vector<512x128xf32>
    %cst = arith.constant 0.000000e+00 : f32
    %7 = vector.broadcast %cst : f32 to vector<512x128xf32>
    %8 = arith.maximumf %6, %7 : vector<512x128xf32>
    %c0_5 = arith.constant 0 : index
    %c0_6 = arith.constant 0 : index
    %9 = vector.load %arg4[%c0_5, %c0_6] : memref<512x128xf32, #tpu.memory_space<vmem>>, vector<512x128xf32>
    tpu.vector_store %arg4[%c0_5, %c0_6], %8 {strides = array<i32>} : memref<512x128xf32, #tpu.memory_space<vmem>>, vector<512x128xf32>,
    return
  }
  func.func @transform_0(%arg0: i32) -> (i32, i32) {
    %c0_i32 = arith.constant 0 : i32
    %c0_i32_0 = arith.constant 0 : i32
    return %arg0, %c0_i32 : i32, i32
  }
  func.func @transform_1(%arg0: i32) -> (i32, i32) {
    %c0_i32 = arith.constant 0 : i32
    %c0_i32_0 = arith.constant 0 : i32
    %c0_i32_1 = arith.constant 0 : i32
    return %c0_i32, %c0_i32_0 : i32, i32
  }
  func.func @transform_2(%arg0: i32) -> (i32, i32) {
    %c0_i32 = arith.constant 0 : i32
    %c0_i32_0 = arith.constant 0 : i32
    %c0_i32_1 = arith.constant 0 : i32
    return %c0_i32, %c0_i32_0 : i32, i32
  }
  func.func @transform_3(%arg0: i32) -> (i32, i32) {
    %c0_i32 = arith.constant 0 : i32
    %c0_i32_0 = arith.constant 0 : i32
    return %arg0, %c0_i32 : i32, i32
  }
}

</mosaic_0001>

<llo_original>
// kernel: up_forward.5
$region0: #{up_forward.5}
  #allocation0 [shape = 'u32[]', space=smem, size = 0x4, offset = 0x4, fixed_abs, tag = 'smem constant byte address 0x4 - core index']
  #allocation1 [shape = 'u32[72,128]{1,0:T(1,128)}', space=vmem, size = 0x9000, scoped, tag = 'internal scratch']
  %s0 = inlined_call_operand.vmem [shape: f32[512,128], index: 0, kind: input, shape index: {}]
  %s1 = inlined_call_operand.vmem [shape: f32[1,128], index: 1, kind: input, shape index: {}]
  %s2 = inlined_call_operand.vmem [shape: f32[1,128], index: 2, kind: input, shape index: {}]
  %s3 = inlined_call_operand.vmem [shape: bf16[512,128], index: 3, kind: output, shape index: {}]
  %s4 = sld [smem:[#allocation0]]
  $region22: #{up_forward.5} parent=0
    _
  %s6 = ssub.s32 1, %s4
  %s7 = scalar_select 0, %s6, %s4
  // Predicated region
  $region2: #{up_forward.5} parent=0 // pred_check
    _
  $region3: #{up_forward.5} parent=0 // pred_check_branch
    %9 = sbr.rel (0) target = $region5
  $region4: #{up_forward.5} parent=0 // pred_region
    _
  $region5: #{up_forward.5} parent=0 // pred_fallthru
    _
  // Predicated region
  $region6: #{up_forward.5} parent=0 // pred_check
    _
  $region7: #{up_forward.5} parent=0 // pred_check_branch
    %11 = sbr.rel (0) target = $region9
  $region8: #{up_forward.5} parent=0 // pred_region
    _
  $region9: #{up_forward.5} parent=0 // pred_fallthru
    _
  // Predicated region
  $region10: #{up_forward.5} parent=0 // pred_check
    _
  $region11: #{up_forward.5} parent=0 // pred_check_branch
    %13 = sbr.rel (0) target = $region13
  $region12: #{up_forward.5} parent=0 // pred_region
    _
  $region13: #{up_forward.5} parent=0 // pred_fallthru
    _
  %v14 = vld [vmem:[%s0] sm:$0xff]
  %v15 = vld [vmem:[%s0 + $0x8] sm:$0xff]
  %v16 = vld [vmem:[%s0 + $0x10] sm:$0xff]
  %v17 = vld [vmem:[%s0 + $0x18] sm:$0xff]
  %v18 = vld [vmem:[%s0 + $0x20] sm:$0xff]
  %v19 = vld [vmem:[%s0 + $0x28] sm:$0xff]
  %v20 = vld [vmem:[%s0 + $0x30] sm:$0xff]
  %v21 = vld [vmem:[%s0 + $0x38] sm:$0xff]
  %v22 = vld [vmem:[%s0 + $0x40] sm:$0xff]
  %v23 = vld [vmem:[%s0 + $0x48] sm:$0xff]
  %v24 = vld [vmem:[%s0 + $0x50] sm:$0xff]
  %v25 = vld [vmem:[%s0 + $0x58] sm:$0xff]
  %v26 = vld [vmem:[%s0 + $0x60] sm:$0xff]
  %v27 = vld [vmem:[%s0 + $0x68] sm:$0xff]
  %v28 = vld [vmem:[%s0 + $0x70] sm:$0xff]
  %v29 = vld [vmem:[%s0 + $0x78] sm:$0xff]
  %v30 = vld [vmem:[%s0 + $0x80] sm:$0xff]
  %v31 = vld [vmem:[%s0 + $0x88] sm:$0xff]
  %v32 = vld [vmem:[%s0 + $0x90] sm:$0xff]
  %v33 = vld [vmem:[%s0 + $0x98] sm:$0xff]
  %v34 = vld [vmem:[%s0 + $0xa0] sm:$0xff]
  %v35 = vld [vmem:[%s0 + $0xa8] sm:$0xff]
  %v36 = vld [vmem:[%s0 + $0xb0] sm:$0xff]
  %v37 = vld [vmem:[%s0 + $0xb8] sm:$0xff]
  %v38 = vld [vmem:[%s0 + $0xc0] sm:$0xff]
  %v39 = vld [vmem:[%s0 + $0xc8] sm:$0xff]
  %v40 = vld [vmem:[%s0 + $0xd0] sm:$0xff]
  %v41 = vld [vmem:[%s0 + $0xd8] sm:$0xff]
  %v42 = vld [vmem:[%s0 + $0xe0] sm:$0xff]
  %v43 = vld [vmem:[%s0 + $0xe8] sm:$0xff]
  %v44 = vld [vmem:[%s0 + $0xf0] sm:$0xff]
  %v45 = vld [vmem:[%s0 + $0xf8] sm:$0xff]
  %v46 = vld [vmem:[%s0 + $0x100] sm:$0xff]
  %v47 = vld [vmem:[%s0 + $0x108] sm:$0xff]
  %v48 = vld [vmem:[%s0 + $0x110] sm:$0xff]
  %v49 = vld [vmem:[%s0 + $0x118] sm:$0xff]
  %v50 = vld [vmem:[%s0 + $0x120] sm:$0xff]
  %v51 = vld [vmem:[%s0 + $0x128] sm:$0xff]
  %v52 = vld [vmem:[%s0 + $0x130] sm:$0xff]
  %v53 = vld [vmem:[%s0 + $0x138] sm:$0xff]
  %v54 = vld [vmem:[%s0 + $0x140] sm:$0xff]
  %v55 = vld [vmem:[%s0 + $0x148] sm:$0xff]
  %v56 = vld [vmem:[%s0 + $0x150] sm:$0xff]
  %v57 = vld [vmem:[%s0 + $0x158] sm:$0xff]
  %v58 = vld [vmem:[%s0 + $0x160] sm:$0xff]
  %v59 = vld [vmem:[%s0 + $0x168] sm:$0xff]
  %v60 = vld [vmem:[%s0 + $0x170] sm:$0xff]
  %v61 = vld [vmem:[%s0 + $0x178] sm:$0xff]
  %v62 = vld [vmem:[%s0 + $0x180] sm:$0xff]
  %v63 = vld [vmem:[%s0 + $0x188] sm:$0xff]
  %v64 = vld [vmem:[%s0 + $0x190] sm:$0xff]
  %v65 = vld [vmem:[%s0 + $0x198] sm:$0xff]
  %v66 = vld [vmem:[%s0 + $0x1a0] sm:$0xff]
  %v67 = vld [vmem:[%s0 + $0x1a8] sm:$0xff]
  %v68 = vld [vmem:[%s0 + $0x1b0] sm:$0xff]
  %v69 = vld [vmem:[%s0 + $0x1b8] sm:$0xff]
  %v70 = vld [vmem:[%s0 + $0x1c0] sm:$0xff]
  %v71 = vld [vmem:[%s0 + $0x1c8] sm:$0xff]
  %v72 = vld [vmem:[%s0 + $0x1d0] sm:$0xff]
  %v73 = vld [vmem:[%s0 + $0x1d8] sm:$0xff]
  %v74 = vld [vmem:[%s0 + $0x1e0] sm:$0xff]
  %v75 = vld [vmem:[%s0 + $0x1e8] sm:$0xff]
  %v76 = vld [vmem:[%s0 + $0x1f0] sm:$0xff]
  %v77 = vld [vmem:[%s0 + $0x1f8] sm:$0xff]
  %v78 = vld [vmem:[%s1] sm:$0x1]
  %v80 = vperm.slane %v78, 0
  %v82 = vmul.f32 %v14, %v80
  %v83 = vmul.f32 %v15, %v80
  %v84 = vmul.f32 %v16, %v80
  %v85 = vmul.f32 %v17, %v80
  %v86 = vmul.f32 %v18, %v80
  %v87 = vmul.f32 %v19, %v80
  %v88 = vmul.f32 %v20, %v80
  %v89 = vmul.f32 %v21, %v80
  %v90 = vmul.f32 %v22, %v80
  %v91 = vmul.f32 %v23, %v80
  %v92 = vmul.f32 %v24, %v80
  %v93 = vmul.f32 %v25, %v80
  %v94 = vmul.f32 %v26, %v80
  %v95 = vmul.f32 %v27, %v80
  %v96 = vmul.f32 %v28, %v80
  %v97 = vmul.f32 %v29, %v80
  %v98 = vmul.f32 %v30, %v80
  %v99 = vmul.f32 %v31, %v80
  %v100 = vmul.f32 %v32, %v80
  %v101 = vmul.f32 %v33, %v80
  %v102 = vmul.f32 %v34, %v80
  %v103 = vmul.f32 %v35, %v80
  %v104 = vmul.f32 %v36, %v80
  %v105 = vmul.f32 %v37, %v80
  %v106 = vmul.f32 %v38, %v80
  %v107 = vmul.f32 %v39, %v80
  %v108 = vmul.f32 %v40, %v80
  %v109 = vmul.f32 %v41, %v80
  %v110 = vmul.f32 %v42, %v80
  %v111 = vmul.f32 %v43, %v80
  %v112 = vmul.f32 %v44, %v80
  %v113 = vmul.f32 %v45, %v80
  %v114 = vmul.f32 %v46, %v80
  %v115 = vmul.f32 %v47, %v80
  %v116 = vmul.f32 %v48, %v80
  %v117 = vmul.f32 %v49, %v80
  %v118 = vmul.f32 %v50, %v80
  %v119 = vmul.f32 %v51, %v80
  %v120 = vmul.f32 %v52, %v80
  %v121 = vmul.f32 %v53, %v80
  %v122 = vmul.f32 %v54, %v80
  %v123 = vmul.f32 %v55, %v80
  %v124 = vmul.f32 %v56, %v80
  %v125 = vmul.f32 %v57, %v80
  %v126 = vmul.f32 %v58, %v80
  %v127 = vmul.f32 %v59, %v80
  %v128 = vmul.f32 %v60, %v80
  %v129 = vmul.f32 %v61, %v80
  %v130 = vmul.f32 %v62, %v80
  %v131 = vmul.f32 %v63, %v80
  %v132 = vmul.f32 %v64, %v80
  %v133 = vmul.f32 %v65, %v80
  %v134 = vmul.f32 %v66, %v80
  %v135 = vmul.f32 %v67, %v80
  %v136 = vmul.f32 %v68, %v80
  %v137 = vmul.f32 %v69, %v80
  %v138 = vmul.f32 %v70, %v80
  %v139 = vmul.f32 %v71, %v80
  %v140 = vmul.f32 %v72, %v80
  %v141 = vmul.f32 %v73, %v80
  %v142 = vmul.f32 %v74, %v80
  %v143 = vmul.f32 %v75, %v80
  %v144 = vmul.f32 %v76, %v80
  %v145 = vmul.f32 %v77, %v80
  %v146 = vld [vmem:[%s2] sm:$0x1]
  %v148 = vperm.slane %v146, 0
  %v150 = vadd.f32 %v82, %v148
  %v151 = vadd.f32 %v83, %v148
  %v152 = vadd.f32 %v84, %v148
  %v153 = vadd.f32 %v85, %v148
  %v154 = vadd.f32 %v86, %v148
  %v155 = vadd.f32 %v87, %v148
  %v156 = vadd.f32 %v88, %v148
  %v157 = vadd.f32 %v89, %v148
  %v158 = vadd.f32 %v90, %v148
  %v159 = vadd.f32 %v91, %v148
  %v160 = vadd.f32 %v92, %v148
  %v161 = vadd.f32 %v93, %v148
  %v162 = vadd.f32 %v94, %v148
  %v163 = vadd.f32 %v95, %v148
  %v164 = vadd.f32 %v96, %v148
  %v165 = vadd.f32 %v97, %v148
  %v166 = vadd.f32 %v98, %v148
  %v167 = vadd.f32 %v99, %v148
  %v168 = vadd.f32 %v100, %v148
  %v169 = vadd.f32 %v101, %v148
  %v170 = vadd.f32 %v102, %v148
  %v171 = vadd.f32 %v103, %v148
  %v172 = vadd.f32 %v104, %v148
  %v173 = vadd.f32 %v105, %v148
  %v174 = vadd.f32 %v106, %v148
  %v175 = vadd.f32 %v107, %v148
  %v176 = vadd.f32 %v108, %v148
  %v177 = vadd.f32 %v109, %v148
  %v178 = vadd.f32 %v110, %v148
  %v179 = vadd.f32 %v111, %v148
  %v180 = vadd.f32 %v112, %v148
  %v181 = vadd.f32 %v113, %v148
  %v182 = vadd.f32 %v114, %v148
  %v183 = vadd.f32 %v115, %v148
  %v184 = vadd.f32 %v116, %v148
  %v185 = vadd.f32 %v117, %v148
  %v186 = vadd.f32 %v118, %v148
  %v187 = vadd.f32 %v119, %v148
  %v188 = vadd.f32 %v120, %v148
  %v189 = vadd.f32 %v121, %v148
  %v190 = vadd.f32 %v122, %v148
  %v191 = vadd.f32 %v123, %v148
  %v192 = vadd.f32 %v124, %v148
  %v193 = vadd.f32 %v125, %v148
  %v194 = vadd.f32 %v126, %v148
  %v195 = vadd.f32 %v127, %v148
  %v196 = vadd.f32 %v128, %v148
  %v197 = vadd.f32 %v129, %v148
  %v198 = vadd.f32 %v130, %v148
  %v199 = vadd.f32 %v131, %v148
  %v200 = vadd.f32 %v132, %v148
  %v201 = vadd.f32 %v133, %v148
  %v202 = vadd.f32 %v134, %v148
  %v203 = vadd.f32 %v135, %v148
  %v204 = vadd.f32 %v136, %v148
  %v205 = vadd.f32 %v137, %v148
  %v206 = vadd.f32 %v138, %v148
  %v207 = vadd.f32 %v139, %v148
  %v208 = vadd.f32 %v140, %v148
  %v209 = vadd.f32 %v141, %v148
  %v210 = vadd.f32 %v142, %v148
  %v211 = vadd.f32 %v143, %v148
  %v212 = vadd.f32 %v144, %v148
  %v213 = vadd.f32 %v145, %v148
  %v214 = vmax.f32 %v150, 0.0
  %v215 = vmax.f32 %v151, 0.0
  %v216 = vmax.f32 %v152, 0.0
  %v217 = vmax.f32 %v153, 0.0
  %v218 = vmax.f32 %v154, 0.0
  %v219 = vmax.f32 %v155, 0.0
  %v220 = vmax.f32 %v156, 0.0
  %v221 = vmax.f32 %v157, 0.0
  %v222 = vmax.f32 %v158, 0.0
  %v223 = vmax.f32 %v159, 0.0
  %v224 = vmax.f32 %v160, 0.0
  %v225 = vmax.f32 %v161, 0.0
  %v226 = vmax.f32 %v162, 0.0
  %v227 = vmax.f32 %v163, 0.0
  %v228 = vmax.f32 %v164, 0.0
  %v229 = vmax.f32 %v165, 0.0
  %v230 = vmax.f32 %v166, 0.0
  %v231 = vmax.f32 %v167, 0.0
  %v232 = vmax.f32 %v168, 0.0
  %v233 = vmax.f32 %v169, 0.0
  %v234 = vmax.f32 %v170, 0.0
  %v235 = vmax.f32 %v171, 0.0
  %v236 = vmax.f32 %v172, 0.0
  %v237 = vmax.f32 %v173, 0.0
  %v238 = vmax.f32 %v174, 0.0
  %v239 = vmax.f32 %v175, 0.0
  %v240 = vmax.f32 %v176, 0.0
  %v241 = vmax.f32 %v177, 0.0
  %v242 = vmax.f32 %v178, 0.0
  %v243 = vmax.f32 %v179, 0.0
  %v244 = vmax.f32 %v180, 0.0
  %v245 = vmax.f32 %v181, 0.0
  %v246 = vmax.f32 %v182, 0.0
  %v247 = vmax.f32 %v183, 0.0
  %v248 = vmax.f32 %v184, 0.0
  %v249 = vmax.f32 %v185, 0.0
  %v250 = vmax.f32 %v186, 0.0
  %v251 = vmax.f32 %v187, 0.0
  %v252 = vmax.f32 %v188, 0.0
  %v253 = vmax.f32 %v189, 0.0
  %v254 = vmax.f32 %v190, 0.0
  %v255 = vmax.f32 %v191, 0.0
  %v256 = vmax.f32 %v192, 0.0
  %v257 = vmax.f32 %v193, 0.0
  %v258 = vmax.f32 %v194, 0.0
  %v259 = vmax.f32 %v195, 0.0
  %v260 = vmax.f32 %v196, 0.0
  %v261 = vmax.f32 %v197, 0.0
  %v262 = vmax.f32 %v198, 0.0
  %v263 = vmax.f32 %v199, 0.0
  %v264 = vmax.f32 %v200, 0.0
  %v265 = vmax.f32 %v201, 0.0
  %v266 = vmax.f32 %v202, 0.0
  %v267 = vmax.f32 %v203, 0.0
  %v268 = vmax.f32 %v204, 0.0
  %v269 = vmax.f32 %v205, 0.0
  %v270 = vmax.f32 %v206, 0.0
  %v271 = vmax.f32 %v207, 0.0
  %v272 = vmax.f32 %v208, 0.0
  %v273 = vmax.f32 %v209, 0.0
  %v274 = vmax.f32 %v210, 0.0
  %v275 = vmax.f32 %v211, 0.0
  %v276 = vmax.f32 %v212, 0.0
  %v277 = vmax.f32 %v213, 0.0
  %v278 = vpack.c.bf16 %v214, %v214
  %v279 = vpack.c.bf16 %v215, %v215
  %v280 = vpack.c.bf16 %v216, %v216
  %v281 = vpack.c.bf16 %v217, %v217
  %v282 = vpack.c.bf16 %v218, %v218
  %v283 = vpack.c.bf16 %v219, %v219
  %v284 = vpack.c.bf16 %v220, %v220
  %v285 = vpack.c.bf16 %v221, %v221
  %v286 = vpack.c.bf16 %v222, %v222
  %v287 = vpack.c.bf16 %v223, %v223
  %v288 = vpack.c.bf16 %v224, %v224
  %v289 = vpack.c.bf16 %v225, %v225
  %v290 = vpack.c.bf16 %v226, %v226
  %v291 = vpack.c.bf16 %v227, %v227
  %v292 = vpack.c.bf16 %v228, %v228
  %v293 = vpack.c.bf16 %v229, %v229
  %v294 = vpack.c.bf16 %v230, %v230
  %v295 = vpack.c.bf16 %v231, %v231
  %v296 = vpack.c.bf16 %v232, %v232
  %v297 = vpack.c.bf16 %v233, %v233
  %v298 = vpack.c.bf16 %v234, %v234
  %v299 = vpack.c.bf16 %v235, %v235
  %v300 = vpack.c.bf16 %v236, %v236
  %v301 = vpack.c.bf16 %v237, %v237
  %v302 = vpack.c.bf16 %v238, %v238
  %v303 = vpack.c.bf16 %v239, %v239
  %v304 = vpack.c.bf16 %v240, %v240
  %v305 = vpack.c.bf16 %v241, %v241
  %v306 = vpack.c.bf16 %v242, %v242
  %v307 = vpack.c.bf16 %v243, %v243
  %v308 = vpack.c.bf16 %v244, %v244
  %v309 = vpack.c.bf16 %v245, %v245
  %v310 = vpack.c.bf16 %v246, %v246
  %v311 = vpack.c.bf16 %v247, %v247
  %v312 = vpack.c.bf16 %v248, %v248
  %v313 = vpack.c.bf16 %v249, %v249
  %v314 = vpack.c.bf16 %v250, %v250
  %v315 = vpack.c.bf16 %v251, %v251
  %v316 = vpack.c.bf16 %v252, %v252
  %v317 = vpack.c.bf16 %v253, %v253
  %v318 = vpack.c.bf16 %v254, %v254
  %v319 = vpack.c.bf16 %v255, %v255
  %v320 = vpack.c.bf16 %v256, %v256
  %v321 = vpack.c.bf16 %v257, %v257
  %v322 = vpack.c.bf16 %v258, %v258
  %v323 = vpack.c.bf16 %v259, %v259
  %v324 = vpack.c.bf16 %v260, %v260
  %v325 = vpack.c.bf16 %v261, %v261
  %v326 = vpack.c.bf16 %v262, %v262
  %v327 = vpack.c.bf16 %v263, %v263
  %v328 = vpack.c.bf16 %v264, %v264
  %v329 = vpack.c.bf16 %v265, %v265
  %v330 = vpack.c.bf16 %v266, %v266
  %v331 = vpack.c.bf16 %v267, %v267
  %v332 = vpack.c.bf16 %v268, %v268
  %v333 = vpack.c.bf16 %v269, %v269
  %v334 = vpack.c.bf16 %v270, %v270
  %v335 = vpack.c.bf16 %v271, %v271
  %v336 = vpack.c.bf16 %v272, %v272
  %v337 = vpack.c.bf16 %v273, %v273
  %v338 = vpack.c.bf16 %v274, %v274
  %v339 = vpack.c.bf16 %v275, %v275
  %v340 = vpack.c.bf16 %v276, %v276
  %v341 = vpack.c.bf16 %v277, %v277
  %342 = vst [vmem:[%s3] sm:$0xf] %v278
  %343 = vst [vmem:[%s3 + $0x4] sm:$0xf] %v279
  %344 = vst [vmem:[%s3 + $0x8] sm:$0xf] %v280
  %345 = vst [vmem:[%s3 + $0xc] sm:$0xf] %v281
  %346 = vst [vmem:[%s3 + $0x10] sm:$0xf] %v282
  %347 = vst [vmem:[%s3 + $0x14] sm:$0xf] %v283
  %348 = vst [vmem:[%s3 + $0x18] sm:$0xf] %v284
  %349 = vst [vmem:[%s3 + $0x1c] sm:$0xf] %v285
  %350 = vst [vmem:[%s3 + $0x20] sm:$0xf] %v286
  %351 = vst [vmem:[%s3 + $0x24] sm:$0xf] %v287
  %352 = vst [vmem:[%s3 + $0x28] sm:$0xf] %v288
  %353 = vst [vmem:[%s3 + $0x2c] sm:$0xf] %v289
  %354 = vst [vmem:[%s3 + $0x30] sm:$0xf] %v290
  %355 = vst [vmem:[%s3 + $0x34] sm:$0xf] %v291
  %356 = vst [vmem:[%s3 + $0x38] sm:$0xf] %v292
  %357 = vst [vmem:[%s3 + $0x3c] sm:$0xf] %v293
  %358 = vst [vmem:[%s3 + $0x40] sm:$0xf] %v294
  %359 = vst [vmem:[%s3 + $0x44] sm:$0xf] %v295
  %360 = vst [vmem:[%s3 + $0x48] sm:$0xf] %v296
  %361 = vst [vmem:[%s3 + $0x4c] sm:$0xf] %v297
  %362 = vst [vmem:[%s3 + $0x50] sm:$0xf] %v298
  %363 = vst [vmem:[%s3 + $0x54] sm:$0xf] %v299
  %364 = vst [vmem:[%s3 + $0x58] sm:$0xf] %v300
  %365 = vst [vmem:[%s3 + $0x5c] sm:$0xf] %v301
  %366 = vst [vmem:[%s3 + $0x60] sm:$0xf] %v302
  %367 = vst [vmem:[%s3 + $0x64] sm:$0xf] %v303
  %368 = vst [vmem:[%s3 + $0x68] sm:$0xf] %v304
  %369 = vst [vmem:[%s3 + $0x6c] sm:$0xf] %v305
  %370 = vst [vmem:[%s3 + $0x70] sm:$0xf] %v306
  %371 = vst [vmem:[%s3 + $0x74] sm:$0xf] %v307
  %372 = vst [vmem:[%s3 + $0x78] sm:$0xf] %v308
  %373 = vst [vmem:[%s3 + $0x7c] sm:$0xf] %v309
  %374 = vst [vmem:[%s3 + $0x80] sm:$0xf] %v310
  %375 = vst [vmem:[%s3 + $0x84] sm:$0xf] %v311
  %376 = vst [vmem:[%s3 + $0x88] sm:$0xf] %v312
  %377 = vst [vmem:[%s3 + $0x8c] sm:$0xf] %v313
  %378 = vst [vmem:[%s3 + $0x90] sm:$0xf] %v314
  %379 = vst [vmem:[%s3 + $0x94] sm:$0xf] %v315
  %380 = vst [vmem:[%s3 + $0x98] sm:$0xf] %v316
  %381 = vst [vmem:[%s3 + $0x9c] sm:$0xf] %v317
  %382 = vst [vmem:[%s3 + $0xa0] sm:$0xf] %v318
  %383 = vst [vmem:[%s3 + $0xa4] sm:$0xf] %v319
  %384 = vst [vmem:[%s3 + $0xa8] sm:$0xf] %v320
  %385 = vst [vmem:[%s3 + $0xac] sm:$0xf] %v321
  %386 = vst [vmem:[%s3 + $0xb0] sm:$0xf] %v322
  %387 = vst [vmem:[%s3 + $0xb4] sm:$0xf] %v323
  %388 = vst [vmem:[%s3 + $0xb8] sm:$0xf] %v324
  %389 = vst [vmem:[%s3 + $0xbc] sm:$0xf] %v325
  %390 = vst [vmem:[%s3 + $0xc0] sm:$0xf] %v326
  %391 = vst [vmem:[%s3 + $0xc4] sm:$0xf] %v327
  %392 = vst [vmem:[%s3 + $0xc8] sm:$0xf] %v328
  %393 = vst [vmem:[%s3 + $0xcc] sm:$0xf] %v329
  %394 = vst [vmem:[%s3 + $0xd0] sm:$0xf] %v330
  %395 = vst [vmem:[%s3 + $0xd4] sm:$0xf] %v331
  %396 = vst [vmem:[%s3 + $0xd8] sm:$0xf] %v332
  %397 = vst [vmem:[%s3 + $0xdc] sm:$0xf] %v333
  %398 = vst [vmem:[%s3 + $0xe0] sm:$0xf] %v334
  %399 = vst [vmem:[%s3 + $0xe4] sm:$0xf] %v335
  %400 = vst [vmem:[%s3 + $0xe8] sm:$0xf] %v336
  %401 = vst [vmem:[%s3 + $0xec] sm:$0xf] %v337
  %402 = vst [vmem:[%s3 + $0xf0] sm:$0xf] %v338
  %403 = vst [vmem:[%s3 + $0xf4] sm:$0xf] %v339
  %404 = vst [vmem:[%s3 + $0xf8] sm:$0xf] %v340
  %405 = vst [vmem:[%s3 + $0xfc] sm:$0xf] %v341
  // Predicated region
  $region14: #{up_forward.5} parent=0 // pred_check
    _
  $region15: #{up_forward.5} parent=0 // pred_check_branch
    %407 = sbr.rel (0) target = $region17
  $region16: #{up_forward.5} parent=0 // pred_region
    _
  $region17: #{up_forward.5} parent=0 // pred_fallthru
    _
  // Predicated region
  $region18: #{up_forward.5} parent=0 // pred_check
    _
  $region19: #{up_forward.5} parent=0 // pred_check_branch
    %409 = sbr.rel (0) target = $region21
  $region20: #{up_forward.5} parent=0 // pred_region
    _
  $region21: #{up_forward.5} parent=0 // pred_fallthru
    _

// kernel: up_forward.4
$region0: #{up_forward.4}
  #allocation0 [shape = 'u32[]', space=smem, size = 0x4, offset = 0x4, fixed_abs, tag = 'smem constant byte address 0x4 - core index']
  #allocation1 [shape = 'u32[72,128]{1,0:T(1,128)}', space=vmem, size = 0x9000, scoped, tag = 'internal scratch']
  %s0 = inlined_call_operand.vmem [shape: bf16[512,72], index: 0, kind: input, shape index: {}]
  %s1 = inlined_call_operand.vmem [shape: bf16[72,128], index: 1, kind: input, shape index: {}]
  %s2 = inlined_call_operand.vmem [shape: f32[512,128], index: 2, kind: output, shape index: {0}]
  %s3 = inlined_call_operand.vmem [shape: f32[1,2,128], index: 3, kind: output, shape index: {1}]
  %4 = xla_tuple %s2, %s3
  %s5 = sld [smem:[#allocation0]]
  $region26: #{up_forward.4} parent=0
    _
  %s7 = ssub.s32 1, %s5
  %s8 = scalar_select 0, %s7, %s5
  // Predicated region
  $region2: #{up_forward.4} parent=0 // pred_check
    _
  $region3: #{up_forward.4} parent=0 // pred_check_branch
    %10 = sbr.rel (0) target = $region5
  $region4: #{up_forward.4} parent=0 // pred_region
    _
  $region5: #{up_forward.4} parent=0 // pred_fallthru
    _
  // Predicated region
  $region6: #{up_forward.4} parent=0 // pred_check
    _
  $region7: #{up_forward.4} parent=0 // pred_check_branch
    %12 = sbr.rel (0) target = $region9
  $region8: #{up_forward.4} parent=0 // pred_region
    _
  $region9: #{up_forward.4} parent=0 // pred_fallthru
    _
  %v14 = vld [vmem:[%s0] sm:$0xf]
  %v15 = vld [vmem:[%s0 + $0x4] sm:$0xf]
  %v16 = vld [vmem:[%s0 + $0x8] sm:$0xf]
  %v17 = vld [vmem:[%s0 + $0xc] sm:$0xf]
  %v18 = vld [vmem:[%s0 + $0x10] sm:$0xf]
  %v19 = vld [vmem:[%s0 + $0x14] sm:$0xf]
  %v20 = vld [vmem:[%s0 + $0x18] sm:$0xf]
  %v21 = vld [vmem:[%s0 + $0x1c] sm:$0xf]
  %v22 = vld [vmem:[%s0 + $0x20] sm:$0xf]
  %v23 = vld [vmem:[%s0 + $0x24] sm:$0xf]
  %v24 = vld [vmem:[%s0 + $0x28] sm:$0xf]
  %v25 = vld [vmem:[%s0 + $0x2c] sm:$0xf]
  %v26 = vld [vmem:[%s0 + $0x30] sm:$0xf]
  %v27 = vld [vmem:[%s0 + $0x34] sm:$0xf]
  %v28 = vld [vmem:[%s0 + $0x38] sm:$0xf]
  %v29 = vld [vmem:[%s0 + $0x3c] sm:$0xf]
  %v30 = vld [vmem:[%s0 + $0x40] sm:$0xf]
  %v31 = vld [vmem:[%s0 + $0x44] sm:$0xf]
  %v32 = vld [vmem:[%s0 + $0x48] sm:$0xf]
  %v33 = vld [vmem:[%s0 + $0x4c] sm:$0xf]
  %v34 = vld [vmem:[%s0 + $0x50] sm:$0xf]
  %v35 = vld [vmem:[%s0 + $0x54] sm:$0xf]
  %v36 = vld [vmem:[%s0 + $0x58] sm:$0xf]
  %v37 = vld [vmem:[%s0 + $0x5c] sm:$0xf]
  %v38 = vld [vmem:[%s0 + $0x60] sm:$0xf]
  %v39 = vld [vmem:[%s0 + $0x64] sm:$0xf]
  %v40 = vld [vmem:[%s0 + $0x68] sm:$0xf]
  %v41 = vld [vmem:[%s0 + $0x6c] sm:$0xf]
  %v42 = vld [vmem:[%s0 + $0x70] sm:$0xf]
  %v43 = vld [vmem:[%s0 + $0x74] sm:$0xf]
  %v44 = vld [vmem:[%s0 + $0x78] sm:$0xf]
  %v45 = vld [vmem:[%s0 + $0x7c] sm:$0xf]
  %v46 = vld [vmem:[%s0 + $0x80] sm:$0xf]
  %v47 = vld [vmem:[%s0 + $0x84] sm:$0xf]
  %v48 = vld [vmem:[%s0 + $0x88] sm:$0xf]
  %v49 = vld [vmem:[%s0 + $0x8c] sm:$0xf]
  %v50 = vld [vmem:[%s0 + $0x90] sm:$0xf]
  %v51 = vld [vmem:[%s0 + $0x94] sm:$0xf]
  %v52 = vld [vmem:[%s0 + $0x98] sm:$0xf]
  %v53 = vld [vmem:[%s0 + $0x9c] sm:$0xf]
  %v54 = vld [vmem:[%s0 + $0xa0] sm:$0xf]
  %v55 = vld [vmem:[%s0 + $0xa4] sm:$0xf]
  %v56 = vld [vmem:[%s0 + $0xa8] sm:$0xf]
  %v57 = vld [vmem:[%s0 + $0xac] sm:$0xf]
  %v58 = vld [vmem:[%s0 + $0xb0] sm:$0xf]
  %v59 = vld [vmem:[%s0 + $0xb4] sm:$0xf]
  %v60 = vld [vmem:[%s0 + $0xb8] sm:$0xf]
  %v61 = vld [vmem:[%s0 + $0xbc] sm:$0xf]
  %v62 = vld [vmem:[%s0 + $0xc0] sm:$0xf]
  %v63 = vld [vmem:[%s0 + $0xc4] sm:$0xf]
  %v64 = vld [vmem:[%s0 + $0xc8] sm:$0xf]
  %v65 = vld [vmem:[%s0 + $0xcc] sm:$0xf]
  %v66 = vld [vmem:[%s0 + $0xd0] sm:$0xf]
  %v67 = vld [vmem:[%s0 + $0xd4] sm:$0xf]
  %v68 = vld [vmem:[%s0 + $0xd8] sm:$0xf]
  %v69 = vld [vmem:[%s0 + $0xdc] sm:$0xf]
  %v70 = vld [vmem:[%s0 + $0xe0] sm:$0xf]
  %v71 = vld [vmem:[%s0 + $0xe4] sm:$0xf]
  %v72 = vld [vmem:[%s0 + $0xe8] sm:$0xf]
  %v73 = vld [vmem:[%s0 + $0xec] sm:$0xf]
  %v74 = vld [vmem:[%s0 + $0xf0] sm:$0xf]
  %v75 = vld [vmem:[%s0 + $0xf4] sm:$0xf]
  %v76 = vld [vmem:[%s0 + $0xf8] sm:$0xf]
  %v77 = vld [vmem:[%s0 + $0xfc] sm:$0xf]
  %v78 = vld [vmem:[%s1] sm:$0xf]
  %v79 = vld [vmem:[%s1 + $0x4] sm:$0xf]
  %v80 = vld [vmem:[%s1 + $0x8] sm:$0xf]
  %v81 = vld [vmem:[%s1 + $0xc] sm:$0xf]
  %v82 = vld [vmem:[%s1 + $0x10] sm:$0xf]
  %v83 = vld [vmem:[%s1 + $0x14] sm:$0xf]
  %v84 = vld [vmem:[%s1 + $0x18] sm:$0xf]
  %v85 = vld [vmem:[%s1 + $0x1c] sm:$0xf]
  %v86 = vld [vmem:[%s1 + $0x20] sm:$0xf]
  %v151 = vunpack.c.l.b16 %v14
  %v152 = vunpack.c.l.b16 %v15
  %v153 = vunpack.c.l.b16 %v16
  %v154 = vunpack.c.l.b16 %v17
  %v155 = vunpack.c.l.b16 %v18
  %v156 = vunpack.c.l.b16 %v19
  %v157 = vunpack.c.l.b16 %v20
  %v158 = vunpack.c.l.b16 %v21
  %v159 = vunpack.c.l.b16 %v22
  %v160 = vunpack.c.l.b16 %v23
  %v161 = vunpack.c.l.b16 %v24
  %v162 = vunpack.c.l.b16 %v25
  %v163 = vunpack.c.l.b16 %v26
  %v164 = vunpack.c.l.b16 %v27
  %v165 = vunpack.c.l.b16 %v28
  %v166 = vunpack.c.l.b16 %v29
  %v167 = vunpack.c.l.b16 %v30
  %v168 = vunpack.c.l.b16 %v31
  %v169 = vunpack.c.l.b16 %v32
  %v170 = vunpack.c.l.b16 %v33
  %v171 = vunpack.c.l.b16 %v34
  %v172 = vunpack.c.l.b16 %v35
  %v173 = vunpack.c.l.b16 %v36
  %v174 = vunpack.c.l.b16 %v37
  %v175 = vunpack.c.l.b16 %v38
  %v176 = vunpack.c.l.b16 %v39
  %v177 = vunpack.c.l.b16 %v40
  %v178 = vunpack.c.l.b16 %v41
  %v179 = vunpack.c.l.b16 %v42
  %v180 = vunpack.c.l.b16 %v43
  %v181 = vunpack.c.l.b16 %v44
  %v182 = vunpack.c.l.b16 %v45
  %v183 = vunpack.c.l.b16 %v46
  %v184 = vunpack.c.l.b16 %v47
  %v185 = vunpack.c.l.b16 %v48
  %v186 = vunpack.c.l.b16 %v49
  %v187 = vunpack.c.l.b16 %v50
  %v188 = vunpack.c.l.b16 %v51
  %v189 = vunpack.c.l.b16 %v52
  %v190 = vunpack.c.l.b16 %v53
  %v191 = vunpack.c.l.b16 %v54
  %v192 = vunpack.c.l.b16 %v55
  %v193 = vunpack.c.l.b16 %v56
  %v194 = vunpack.c.l.b16 %v57
  %v195 = vunpack.c.l.b16 %v58
  %v196 = vunpack.c.l.b16 %v59
  %v197 = vunpack.c.l.b16 %v60
  %v198 = vunpack.c.l.b16 %v61
  %v199 = vunpack.c.l.b16 %v62
  %v200 = vunpack.c.l.b16 %v63
  %v201 = vunpack.c.l.b16 %v64
  %v202 = vunpack.c.l.b16 %v65
  %v203 = vunpack.c.l.b16 %v66
  %v204 = vunpack.c.l.b16 %v67
  %v205 = vunpack.c.l.b16 %v68
  %v206 = vunpack.c.l.b16 %v69
  %v207 = vunpack.c.l.b16 %v70
  %v208 = vunpack.c.l.b16 %v71
  %v209 = vunpack.c.l.b16 %v72
  %v210 = vunpack.c.l.b16 %v73
  %v211 = vunpack.c.l.b16 %v74
  %v212 = vunpack.c.l.b16 %v75
  %v213 = vunpack.c.l.b16 %v76
  %v214 = vunpack.c.l.b16 %v77
  %v215 = vpack.c.b16 %v152, %v151
  %v216 = vpack.c.b16 %v154, %v153
  %v217 = vpack.c.b16 %v156, %v155
  %v218 = vpack.c.b16 %v158, %v157
  %v219 = vpack.c.b16 %v160, %v159
  %v220 = vpack.c.b16 %v162, %v161
  %v221 = vpack.c.b16 %v164, %v163
  %v222 = vpack.c.b16 %v166, %v165
  %v223 = vpack.c.b16 %v168, %v167
  %v224 = vpack.c.b16 %v170, %v169
  %v225 = vpack.c.b16 %v172, %v171
  %v226 = vpack.c.b16 %v174, %v173
  %v227 = vpack.c.b16 %v176, %v175
  %v228 = vpack.c.b16 %v178, %v177
  %v229 = vpack.c.b16 %v180, %v179
  %v230 = vpack.c.b16 %v182, %v181
  %v231 = vpack.c.b16 %v184, %v183
  %v232 = vpack.c.b16 %v186, %v185
  %v233 = vpack.c.b16 %v188, %v187
  %v234 = vpack.c.b16 %v190, %v189
  %v235 = vpack.c.b16 %v192, %v191
  %v236 = vpack.c.b16 %v194, %v193
  %v237 = vpack.c.b16 %v196, %v195
  %v238 = vpack.c.b16 %v198, %v197
  %v239 = vpack.c.b16 %v200, %v199
  %v240 = vpack.c.b16 %v202, %v201
  %v241 = vpack.c.b16 %v204, %v203
  %v242 = vpack.c.b16 %v206, %v205
  %v243 = vpack.c.b16 %v208, %v207
  %v244 = vpack.c.b16 %v210, %v209
  %v245 = vpack.c.b16 %v212, %v211
  %v246 = vpack.c.b16 %v214, %v213
  %v256 = vunpack.c.l.b16 %v78
  %v257 = vunpack.c.l.b16 %v79
  %v258 = vunpack.c.l.b16 %v80
  %v259 = vunpack.c.l.b16 %v81
  %v260 = vunpack.c.l.b16 %v82
  %v261 = vunpack.c.l.b16 %v83
  %v262 = vunpack.c.l.b16 %v84
  %v263 = vunpack.c.l.b16 %v85
  %v264 = vunpack.c.l.b16 %v86
  %v265 = vpack.c.b16 %v257, %v256
  %v266 = vpack.c.b16 %v259, %v258
  %v267 = vpack.c.b16 %v261, %v260
  %v268 = vpack.c.b16 %v263, %v262
  %v269 = vpack.c.b16 %v264, %v264
  %vm274 = vcmask 588800
  %v276 = vsel %vm274, %v215, 0
  %v279 = vsel %vm274, %v216, 0
  %v282 = vsel %vm274, %v217, 0
  %v285 = vsel %vm274, %v218, 0
  %v288 = vsel %vm274, %v219, 0
  %v291 = vsel %vm274, %v220, 0
  %v294 = vsel %vm274, %v221, 0
  %v297 = vsel %vm274, %v222, 0
  %v300 = vsel %vm274, %v223, 0
  %v303 = vsel %vm274, %v224, 0
  %v306 = vsel %vm274, %v225, 0
  %v309 = vsel %vm274, %v226, 0
  %v312 = vsel %vm274, %v227, 0
  %v315 = vsel %vm274, %v228, 0
  %v318 = vsel %vm274, %v229, 0
  %v321 = vsel %vm274, %v230, 0
  %v324 = vsel %vm274, %v231, 0
  %v327 = vsel %vm274, %v232, 0
  %v330 = vsel %vm274, %v233, 0
  %v333 = vsel %vm274, %v234, 0
  %v336 = vsel %vm274, %v235, 0
  %v339 = vsel %vm274, %v236, 0
  %v342 = vsel %vm274, %v237, 0
  %v345 = vsel %vm274, %v238, 0
  %v348 = vsel %vm274, %v239, 0
  %v351 = vsel %vm274, %v240, 0
  %v354 = vsel %vm274, %v241, 0
  %v357 = vsel %vm274, %v242, 0
  %v360 = vsel %vm274, %v243, 0
  %v363 = vsel %vm274, %v244, 0
  %v366 = vsel %vm274, %v245, 0
  %v369 = vsel %vm274, %v246, 0
  %vm371 = vcmask 1043456
  %v373 = vsel %vm371, %v269, 0
  %375 = vmatpush.bf16.msra.mxu0 0
  %376 = vmatpush.bf16.msra.mxu0 0
  %377 = vmatpush.bf16.msra.mxu0 0
  %378 = vmatpush.bf16.msra.mxu0 %v373
  %379 = vmatpush.bf16.msra.mxu0 %v268
  %380 = vmatpush.bf16.msra.mxu0 %v267
  %381 = vmatpush.bf16.msra.mxu0 %v266
  %382 = vmatpush.bf16.msra.mxu0 %v265
  %383 = vmatmul.bf16.gmra.mxu0 %v276
  %v384 = vpop.f32.mrf.mxu0
  %v385 = vadd.f32 0.0, %v384
  %v386 = vpop.f32.mrf.mxu0
  %v387 = vadd.f32 0.0, %v386
  %388 = vmatmul.bf16.gmra.mxu0 %v279
  %v389 = vpop.f32.mrf.mxu0
  %v390 = vadd.f32 0.0, %v389
  %v391 = vpop.f32.mrf.mxu0
  %v392 = vadd.f32 0.0, %v391
  %393 = vmatmul.bf16.gmra.mxu0 %v282
  %v394 = vpop.f32.mrf.mxu0
  %v395 = vadd.f32 0.0, %v394
  %v396 = vpop.f32.mrf.mxu0
  %v397 = vadd.f32 0.0, %v396
  %398 = vmatmul.bf16.gmra.mxu0 %v285
  %v399 = vpop.f32.mrf.mxu0
  %v400 = vadd.f32 0.0, %v399
  %v401 = vpop.f32.mrf.mxu0
  %v402 = vadd.f32 0.0, %v401
  %403 = vmatmul.bf16.gmra.mxu0 %v288
  %v404 = vpop.f32.mrf.mxu0
  %v405 = vadd.f32 0.0, %v404
  %v406 = vpop.f32.mrf.mxu0
  %v407 = vadd.f32 0.0, %v406
  %408 = vmatmul.bf16.gmra.mxu0 %v291
  %v409 = vpop.f32.mrf.mxu0
  %v410 = vadd.f32 0.0, %v409
  %v411 = vpop.f32.mrf.mxu0
  %v412 = vadd.f32 0.0, %v411
  %413 = vmatmul.bf16.gmra.mxu0 %v294
  %v414 = vpop.f32.mrf.mxu0
  %v415 = vadd.f32 0.0, %v414
  %v416 = vpop.f32.mrf.mxu0
  %v417 = vadd.f32 0.0, %v416
  %418 = vmatmul.bf16.gmra.mxu0 %v297
  %v419 = vpop.f32.mrf.mxu0
  %v420 = vadd.f32 0.0, %v419
  %v421 = vpop.f32.mrf.mxu0
  %v422 = vadd.f32 0.0, %v421
  %423 = vmatmul.bf16.gmra.mxu0 %v300
  %v424 = vpop.f32.mrf.mxu0
  %v425 = vadd.f32 0.0, %v424
  %v426 = vpop.f32.mrf.mxu0
  %v427 = vadd.f32 0.0, %v426
  %428 = vmatmul.bf16.gmra.mxu0 %v303
  %v429 = vpop.f32.mrf.mxu0
  %v430 = vadd.f32 0.0, %v429
  %v431 = vpop.f32.mrf.mxu0
  %v432 = vadd.f32 0.0, %v431
  %433 = vmatmul.bf16.gmra.mxu0 %v306
  %v434 = vpop.f32.mrf.mxu0
  %v435 = vadd.f32 0.0, %v434
  %v436 = vpop.f32.mrf.mxu0
  %v437 = vadd.f32 0.0, %v436
  %438 = vmatmul.bf16.gmra.mxu0 %v309
  %v439 = vpop.f32.mrf.mxu0
  %v440 = vadd.f32 0.0, %v439
  %v441 = vpop.f32.mrf.mxu0
  %v442 = vadd.f32 0.0, %v441
  %443 = vmatmul.bf16.gmra.mxu0 %v312
  %v444 = vpop.f32.mrf.mxu0
  %v445 = vadd.f32 0.0, %v444
  %v446 = vpop.f32.mrf.mxu0
  %v447 = vadd.f32 0.0, %v446
  %448 = vmatmul.bf16.gmra.mxu0 %v315
  %v449 = vpop.f32.mrf.mxu0
  %v450 = vadd.f32 0.0, %v449
  %v451 = vpop.f32.mrf.mxu0
  %v452 = vadd.f32 0.0, %v451
  %453 = vmatmul.bf16.gmra.mxu0 %v318
  %v454 = vpop.f32.mrf.mxu0
  %v455 = vadd.f32 0.0, %v454
  %v456 = vpop.f32.mrf.mxu0
  %v457 = vadd.f32 0.0, %v456
  %458 = vmatmul.bf16.gmra.mxu0 %v321
  %v459 = vpop.f32.mrf.mxu0
  %v460 = vadd.f32 0.0, %v459
  %v461 = vpop.f32.mrf.mxu0
  %v462 = vadd.f32 0.0, %v461
  %463 = vmatmul.bf16.gmra.mxu0 %v324
  %v464 = vpop.f32.mrf.mxu0
  %v465 = vadd.f32 0.0, %v464
  %v466 = vpop.f32.mrf.mxu0
  %v467 = vadd.f32 0.0, %v466
  %468 = vmatmul.bf16.gmra.mxu0 %v327
  %v469 = vpop.f32.mrf.mxu0
  %v470 = vadd.f32 0.0, %v469
  %v471 = vpop.f32.mrf.mxu0
  %v472 = vadd.f32 0.0, %v471
  %473 = vmatmul.bf16.gmra.mxu0 %v330
  %v474 = vpop.f32.mrf.mxu0
  %v475 = vadd.f32 0.0, %v474
  %v476 = vpop.f32.mrf.mxu0
  %v477 = vadd.f32 0.0, %v476
  %478 = vmatmul.bf16.gmra.mxu0 %v333
  %v479 = vpop.f32.mrf.mxu0
  %v480 = vadd.f32 0.0, %v479
  %v481 = vpop.f32.mrf.mxu0
  %v482 = vadd.f32 0.0, %v481
  %483 = vmatmul.bf16.gmra.mxu0 %v336
  %v484 = vpop.f32.mrf.mxu0
  %v485 = vadd.f32 0.0, %v484
  %v486 = vpop.f32.mrf.mxu0
  %v487 = vadd.f32 0.0, %v486
  %488 = vmatmul.bf16.gmra.mxu0 %v339
  %v489 = vpop.f32.mrf.mxu0
  %v490 = vadd.f32 0.0, %v489
  %v491 = vpop.f32.mrf.mxu0
  %v492 = vadd.f32 0.0, %v491
  %493 = vmatmul.bf16.gmra.mxu0 %v342
  %v494 = vpop.f32.mrf.mxu0
  %v495 = vadd.f32 0.0, %v494
  %v496 = vpop.f32.mrf.mxu0
  %v497 = vadd.f32 0.0, %v496
  %498 = vmatmul.bf16.gmra.mxu0 %v345
  %v499 = vpop.f32.mrf.mxu0
  %v500 = vadd.f32 0.0, %v499
  %v501 = vpop.f32.mrf.mxu0
  %v502 = vadd.f32 0.0, %v501
  %503 = vmatmul.bf16.gmra.mxu0 %v348
  %v504 = vpop.f32.mrf.mxu0
  %v505 = vadd.f32 0.0, %v504
  %v506 = vpop.f32.mrf.mxu0
  %v507 = vadd.f32 0.0, %v506
  %508 = vmatmul.bf16.gmra.mxu0 %v351
  %v509 = vpop.f32.mrf.mxu0
  %v510 = vadd.f32 0.0, %v509
  %v511 = vpop.f32.mrf.mxu0
  %v512 = vadd.f32 0.0, %v511
  %513 = vmatmul.bf16.gmra.mxu0 %v354
  %v514 = vpop.f32.mrf.mxu0
  %v515 = vadd.f32 0.0, %v514
  %v516 = vpop.f32.mrf.mxu0
  %v517 = vadd.f32 0.0, %v516
  %518 = vmatmul.bf16.gmra.mxu0 %v357
  %v519 = vpop.f32.mrf.mxu0
  %v520 = vadd.f32 0.0, %v519
  %v521 = vpop.f32.mrf.mxu0
  %v522 = vadd.f32 0.0, %v521
  %523 = vmatmul.bf16.gmra.mxu0 %v360
  %v524 = vpop.f32.mrf.mxu0
  %v525 = vadd.f32 0.0, %v524
  %v526 = vpop.f32.mrf.mxu0
  %v527 = vadd.f32 0.0, %v526
  %528 = vmatmul.bf16.gmra.mxu0 %v363
  %v529 = vpop.f32.mrf.mxu0
  %v530 = vadd.f32 0.0, %v529
  %v531 = vpop.f32.mrf.mxu0
  %v532 = vadd.f32 0.0, %v531
  %533 = vmatmul.bf16.gmra.mxu0 %v366
  %v534 = vpop.f32.mrf.mxu0
  %v535 = vadd.f32 0.0, %v534
  %v536 = vpop.f32.mrf.mxu0
  %v537 = vadd.f32 0.0, %v536
  %538 = vmatmul.bf16.gmra.mxu0 %v369
  %v539 = vpop.f32.mrf.mxu0
  %v540 = vadd.f32 0.0, %v539
  %v541 = vpop.f32.mrf.mxu0
  %v542 = vadd.f32 0.0, %v541
  %543 = vdwg.mxu0
  %544 = vst [vmem:[%s2] sm:$0xff] %v385
  %545 = vst [vmem:[%s2 + $0x8] sm:$0xff] %v387
  %546 = vst [vmem:[%s2 + $0x10] sm:$0xff] %v390
  %547 = vst [vmem:[%s2 + $0x18] sm:$0xff] %v392
  %548 = vst [vmem:[%s2 + $0x20] sm:$0xff] %v395
  %549 = vst [vmem:[%s2 + $0x28] sm:$0xff] %v397
  %550 = vst [vmem:[%s2 + $0x30] sm:$0xff] %v400
  %551 = vst [vmem:[%s2 + $0x38] sm:$0xff] %v402
  %552 = vst [vmem:[%s2 + $0x40] sm:$0xff] %v405
  %553 = vst [vmem:[%s2 + $0x48] sm:$0xff] %v407
  %554 = vst [vmem:[%s2 + $0x50] sm:$0xff] %v410
  %555 = vst [vmem:[%s2 + $0x58] sm:$0xff] %v412
  %556 = vst [vmem:[%s2 + $0x60] sm:$0xff] %v415
  %557 = vst [vmem:[%s2 + $0x68] sm:$0xff] %v417
  %558 = vst [vmem:[%s2 + $0x70] sm:$0xff] %v420
  %559 = vst [vmem:[%s2 + $0x78] sm:$0xff] %v422
  %560 = vst [vmem:[%s2 + $0x80] sm:$0xff] %v425
  %561 = vst [vmem:[%s2 + $0x88] sm:$0xff] %v427
  %562 = vst [vmem:[%s2 + $0x90] sm:$0xff] %v430
  %563 = vst [vmem:[%s2 + $0x98] sm:$0xff] %v432
  %564 = vst [vmem:[%s2 + $0xa0] sm:$0xff] %v435
  %565 = vst [vmem:[%s2 + $0xa8] sm:$0xff] %v437
  %566 = vst [vmem:[%s2 + $0xb0] sm:$0xff] %v440
  %567 = vst [vmem:[%s2 + $0xb8] sm:$0xff] %v442
  %568 = vst [vmem:[%s2 + $0xc0] sm:$0xff] %v445
  %569 = vst [vmem:[%s2 + $0xc8] sm:$0xff] %v447
  %570 = vst [vmem:[%s2 + $0xd0] sm:$0xff] %v450
  %571 = vst [vmem:[%s2 + $0xd8] sm:$0xff] %v452
  %572 = vst [vmem:[%s2 + $0xe0] sm:$0xff] %v455
  %573 = vst [vmem:[%s2 + $0xe8] sm:$0xff] %v457
  %574 = vst [vmem:[%s2 + $0xf0] sm:$0xff] %v460
  %575 = vst [vmem:[%s2 + $0xf8] sm:$0xff] %v462
  %576 = vst [vmem:[%s2 + $0x100] sm:$0xff] %v465
  %577 = vst [vmem:[%s2 + $0x108] sm:$0xff] %v467
  %578 = vst [vmem:[%s2 + $0x110] sm:$0xff] %v470
  %579 = vst [vmem:[%s2 + $0x118] sm:$0xff] %v472
  %580 = vst [vmem:[%s2 + $0x120] sm:$0xff] %v475
  %581 = vst [vmem:[%s2 + $0x128] sm:$0xff] %v477
  %582 = vst [vmem:[%s2 + $0x130] sm:$0xff] %v480
  %583 = vst [vmem:[%s2 + $0x138] sm:$0xff] %v482
  %584 = vst [vmem:[%s2 + $0x140] sm:$0xff] %v485
  %585 = vst [vmem:[%s2 + $0x148] sm:$0xff] %v487
  %586 = vst [vmem:[%s2 + $0x150] sm:$0xff] %v490
  %587 = vst [vmem:[%s2 + $0x158] sm:$0xff] %v492
  %588 = vst [vmem:[%s2 + $0x160] sm:$0xff] %v495
  %589 = vst [vmem:[%s2 + $0x168] sm:$0xff] %v497
  %590 = vst [vmem:[%s2 + $0x170] sm:$0xff] %v500
  %591 = vst [vmem:[%s2 + $0x178] sm:$0xff] %v502
  %592 = vst [vmem:[%s2 + $0x180] sm:$0xff] %v505
  %593 = vst [vmem:[%s2 + $0x188] sm:$0xff] %v507
  %594 = vst [vmem:[%s2 + $0x190] sm:$0xff] %v510
  %595 = vst [vmem:[%s2 + $0x198] sm:$0xff] %v512
  %596 = vst [vmem:[%s2 + $0x1a0] sm:$0xff] %v515
  %597 = vst [vmem:[%s2 + $0x1a8] sm:$0xff] %v517
  %598 = vst [vmem:[%s2 + $0x1b0] sm:$0xff] %v520
  %599 = vst [vmem:[%s2 + $0x1b8] sm:$0xff] %v522
  %600 = vst [vmem:[%s2 + $0x1c0] sm:$0xff] %v525
  %601 = vst [vmem:[%s2 + $0x1c8] sm:$0xff] %v527
  %602 = vst [vmem:[%s2 + $0x1d0] sm:$0xff] %v530
  %603 = vst [vmem:[%s2 + $0x1d8] sm:$0xff] %v532
  %604 = vst [vmem:[%s2 + $0x1e0] sm:$0xff] %v535
  %605 = vst [vmem:[%s2 + $0x1e8] sm:$0xff] %v537
  %606 = vst [vmem:[%s2 + $0x1f0] sm:$0xff] %v540
  %607 = vst [vmem:[%s2 + $0x1f8] sm:$0xff] %v542
  %v608 = vadd.f32 %v385, %v387
  %v609 = vadd.f32 %v608, %v390
  %v610 = vadd.f32 %v609, %v392
  %v611 = vadd.f32 %v610, %v395
  %v612 = vadd.f32 %v611, %v397
  %v613 = vadd.f32 %v612, %v400
  %v614 = vadd.f32 %v613, %v402
  %v615 = vadd.f32 %v614, %v405
  %v616 = vadd.f32 %v615, %v407
  %v617 = vadd.f32 %v616, %v410
  %v618 = vadd.f32 %v617, %v412
  %v619 = vadd.f32 %v618, %v415
  %v620 = vadd.f32 %v619, %v417
  %v621 = vadd.f32 %v620, %v420
  %v622 = vadd.f32 %v621, %v422
  %v623 = vadd.f32 %v622, %v425
  %v624 = vadd.f32 %v623, %v427
  %v625 = vadd.f32 %v624, %v430
  %v626 = vadd.f32 %v625, %v432
  %v627 = vadd.f32 %v626, %v435
  %v628 = vadd.f32 %v627, %v437
  %v629 = vadd.f32 %v628, %v440
  %v630 = vadd.f32 %v629, %v442
  %v631 = vadd.f32 %v630, %v445
  %v632 = vadd.f32 %v631, %v447
  %v633 = vadd.f32 %v632, %v450
  %v634 = vadd.f32 %v633, %v452
  %v635 = vadd.f32 %v634, %v455
  %v636 = vadd.f32 %v635, %v457
  %v637 = vadd.f32 %v636, %v460
  %v638 = vadd.f32 %v637, %v462
  %v639 = vadd.f32 %v638, %v465
  %v640 = vadd.f32 %v639, %v467
  %v641 = vadd.f32 %v640, %v470
  %v642 = vadd.f32 %v641, %v472
  %v643 = vadd.f32 %v642, %v475
  %v644 = vadd.f32 %v643, %v477
  %v645 = vadd.f32 %v644, %v480
  %v646 = vadd.f32 %v645, %v482
  %v647 = vadd.f32 %v646, %v485
  %v648 = vadd.f32 %v647, %v487
  %v649 = vadd.f32 %v648, %v490
  %v650 = vadd.f32 %v649, %v492
  %v651 = vadd.f32 %v650, %v495
  %v652 = vadd.f32 %v651, %v497
  %v653 = vadd.f32 %v652, %v500
  %v654 = vadd.f32 %v653, %v502
  %v655 = vadd.f32 %v654, %v505
  %v656 = vadd.f32 %v655, %v507
  %v657 = vadd.f32 %v656, %v510
  %v658 = vadd.f32 %v657, %v512
  %v659 = vadd.f32 %v658, %v515
  %v660 = vadd.f32 %v659, %v517
  %v661 = vadd.f32 %v660, %v520
  %v662 = vadd.f32 %v661, %v522
  %v663 = vadd.f32 %v662, %v525
  %v664 = vadd.f32 %v663, %v527
  %v665 = vadd.f32 %v664, %v530
  %v666 = vadd.f32 %v665, %v532
  %v667 = vadd.f32 %v666, %v535
  %v668 = vadd.f32 %v667, %v537
  %v669 = vadd.f32 %v668, %v540
  %v670 = vadd.f32 %v669, %v542
  %v671 = vrot.slane %v670, 4
  %v672 = vadd.f32 %v670, %v671
  %v673 = vrot.slane %v672, 2
  %v674 = vadd.f32 %v672, %v673
  %v675 = vrot.slane %v674, 1
  %v676 = vadd.f32 %v674, %v675
  %677 = vst [vmem:[%s3] sm:$0x1] %v676
  %v678 = vmul.f32 %v385, %v385
  %v679 = vmul.f32 %v387, %v387
  %v680 = vmul.f32 %v390, %v390
  %v681 = vmul.f32 %v392, %v392
  %v682 = vmul.f32 %v395, %v395
  %v683 = vmul.f32 %v397, %v397
  %v684 = vmul.f32 %v400, %v400
  %v685 = vmul.f32 %v402, %v402
  %v686 = vmul.f32 %v405, %v405
  %v687 = vmul.f32 %v407, %v407
  %v688 = vmul.f32 %v410, %v410
  %v689 = vmul.f32 %v412, %v412
  %v690 = vmul.f32 %v415, %v415
  %v691 = vmul.f32 %v417, %v417
  %v692 = vmul.f32 %v420, %v420
  %v693 = vmul.f32 %v422, %v422
  %v694 = vmul.f32 %v425, %v425
  %v695 = vmul.f32 %v427, %v427
  %v696 = vmul.f32 %v430, %v430
  %v697 = vmul.f32 %v432, %v432
  %v698 = vmul.f32 %v435, %v435
  %v699 = vmul.f32 %v437, %v437
  %v700 = vmul.f32 %v440, %v440
  %v701 = vmul.f32 %v442, %v442
  %v702 = vmul.f32 %v445, %v445
  %v703 = vmul.f32 %v447, %v447
  %v704 = vmul.f32 %v450, %v450
  %v705 = vmul.f32 %v452, %v452
  %v706 = vmul.f32 %v455, %v455
  %v707 = vmul.f32 %v457, %v457
  %v708 = vmul.f32 %v460, %v460
  %v709 = vmul.f32 %v462, %v462
  %v710 = vmul.f32 %v465, %v465
  %v711 = vmul.f32 %v467, %v467
  %v712 = vmul.f32 %v470, %v470
  %v713 = vmul.f32 %v472, %v472
  %v714 = vmul.f32 %v475, %v475
  %v715 = vmul.f32 %v477, %v477
  %v716 = vmul.f32 %v480, %v480
  %v717 = vmul.f32 %v482, %v482
  %v718 = vmul.f32 %v485, %v485
  %v719 = vmul.f32 %v487, %v487
  %v720 = vmul.f32 %v490, %v490
  %v721 = vmul.f32 %v492, %v492
  %v722 = vmul.f32 %v495, %v495
  %v723 = vmul.f32 %v497, %v497
  %v724 = vmul.f32 %v500, %v500
  %v725 = vmul.f32 %v502, %v502
  %v726 = vmul.f32 %v505, %v505
  %v727 = vmul.f32 %v507, %v507
  %v728 = vmul.f32 %v510, %v510
  %v729 = vmul.f32 %v512, %v512
  %v730 = vmul.f32 %v515, %v515
  %v731 = vmul.f32 %v517, %v517
  %v732 = vmul.f32 %v520, %v520
  %v733 = vmul.f32 %v522, %v522
  %v734 = vmul.f32 %v525, %v525
  %v735 = vmul.f32 %v527, %v527
  %v736 = vmul.f32 %v530, %v530
  %v737 = vmul.f32 %v532, %v532
  %v738 = vmul.f32 %v535, %v535
  %v739 = vmul.f32 %v537, %v537
  %v740 = vmul.f32 %v540, %v540
  %v741 = vmul.f32 %v542, %v542
  %v742 = vadd.f32 %v678, %v679
  %v743 = vadd.f32 %v742, %v680
  %v744 = vadd.f32 %v743, %v681
  %v745 = vadd.f32 %v744, %v682
  %v746 = vadd.f32 %v745, %v683
  %v747 = vadd.f32 %v746, %v684
  %v748 = vadd.f32 %v747, %v685
  %v749 = vadd.f32 %v748, %v686
  %v750 = vadd.f32 %v749, %v687
  %v751 = vadd.f32 %v750, %v688
  %v752 = vadd.f32 %v751, %v689
  %v753 = vadd.f32 %v752, %v690
  %v754 = vadd.f32 %v753, %v691
  %v755 = vadd.f32 %v754, %v692
  %v756 = vadd.f32 %v755, %v693
  %v757 = vadd.f32 %v756, %v694
  %v758 = vadd.f32 %v757, %v695
  %v759 = vadd.f32 %v758, %v696
  %v760 = vadd.f32 %v759, %v697
  %v761 = vadd.f32 %v760, %v698
  %v762 = vadd.f32 %v761, %v699
  %v763 = vadd.f32 %v762, %v700
  %v764 = vadd.f32 %v763, %v701
  %v765 = vadd.f32 %v764, %v702
  %v766 = vadd.f32 %v765, %v703
  %v767 = vadd.f32 %v766, %v704
  %v768 = vadd.f32 %v767, %v705
  %v769 = vadd.f32 %v768, %v706
  %v770 = vadd.f32 %v769, %v707
  %v771 = vadd.f32 %v770, %v708
  %v772 = vadd.f32 %v771, %v709
  %v773 = vadd.f32 %v772, %v710
  %v774 = vadd.f32 %v773, %v711
  %v775 = vadd.f32 %v774, %v712
  %v776 = vadd.f32 %v775, %v713
  %v777 = vadd.f32 %v776, %v714
  %v778 = vadd.f32 %v777, %v715
  %v779 = vadd.f32 %v778, %v716
  %v780 = vadd.f32 %v779, %v717
  %v781 = vadd.f32 %v780, %v718
  %v782 = vadd.f32 %v781, %v719
  %v783 = vadd.f32 %v782, %v720
  %v784 = vadd.f32 %v783, %v721
  %v785 = vadd.f32 %v784, %v722
  %v786 = vadd.f32 %v785, %v723
  %v787 = vadd.f32 %v786, %v724
  %v788 = vadd.f32 %v787, %v725
  %v789 = vadd.f32 %v788, %v726
  %v790 = vadd.f32 %v789, %v727
  %v791 = vadd.f32 %v790, %v728
  %v792 = vadd.f32 %v791, %v729
  %v793 = vadd.f32 %v792, %v730
  %v794 = vadd.f32 %v793, %v731
  %v795 = vadd.f32 %v794, %v732
  %v796 = vadd.f32 %v795, %v733
  %v797 = vadd.f32 %v796, %v734
  %v798 = vadd.f32 %v797, %v735
  %v799 = vadd.f32 %v798, %v736
  %v800 = vadd.f32 %v799, %v737
  %v801 = vadd.f32 %v800, %v738
  %v802 = vadd.f32 %v801, %v739
  %v803 = vadd.f32 %v802, %v740
  %v804 = vadd.f32 %v803, %v741
  %v805 = vrot.slane %v804, 4
  %v806 = vadd.f32 %v804, %v805
  %v807 = vrot.slane %v806, 2
  %v808 = vadd.f32 %v806, %v807
  %v809 = vrot.slane %v808, 1
  %v810 = vadd.f32 %v808, %v809
  %811 = vst [vmem:[%s3 + $0x1] sm:$0x1] %v810
  // Predicated region
  $region10: #{up_forward.4} parent=0 // pred_check
    _
  $region11: #{up_forward.4} parent=0 // pred_check_branch
    %813 = sbr.rel (0) target = $region13
  $region12: #{up_forward.4} parent=0 // pred_region
    _
  $region13: #{up_forward.4} parent=0 // pred_fallthru
    _
  // Predicated region
  $region14: #{up_forward.4} parent=0 // pred_check
    _
  $region15: #{up_forward.4} parent=0 // pred_check_branch
    %815 = sbr.rel (0) target = $region17
  $region16: #{up_forward.4} parent=0 // pred_region
    _
  $region17: #{up_forward.4} parent=0 // pred_fallthru
    _
  // Predicated region
  $region18: #{up_forward.4} parent=0 // pred_check
    _
  $region19: #{up_forward.4} parent=0 // pred_check_branch
    %817 = sbr.rel (0) target = $region21
  $region20: #{up_forward.4} parent=0 // pred_region
    _
  $region21: #{up_forward.4} parent=0 // pred_fallthru
    _
  // Predicated region
  $region22: #{up_forward.4} parent=0 // pred_check
    _
  $region23: #{up_forward.4} parent=0 // pred_check_branch
    %819 = sbr.rel (0) target = $region25
  $region24: #{up_forward.4} parent=0 // pred_region
    _
  $region25: #{up_forward.4} parent=0 // pred_fallthru
    _

// kernel: up_forward.6
$region0: #{up_forward.6}
  #allocation0 [shape = 'u32[]', space=smem, size = 0x4, offset = 0x4, fixed_abs, tag = 'smem constant byte address 0x4 - core index']
  #allocation1 [shape = 'u32[72,128]{1,0:T(1,128)}', space=vmem, size = 0x9000, scoped, tag = 'internal scratch']
  %s0 = inlined_call_operand.vmem [shape: bf16[512,36], index: 0, kind: input, shape index: {}]
  %s1 = inlined_call_operand.vmem [shape: bf16[36,128], index: 1, kind: input, shape index: {}]
  %s2 = inlined_call_operand.vmem [shape: f32[512,128], index: 2, kind: output, shape index: {0}]
  %s3 = inlined_call_operand.vmem [shape: f32[1,2,128], index: 3, kind: output, shape index: {1}]
  %4 = xla_tuple %s2, %s3
  %s5 = sld [smem:[#allocation0]]
  $region26: #{up_forward.6} parent=0
    _
  %s7 = ssub.s32 1, %s5
  %s8 = scalar_select 0, %s7, %s5
  // Predicated region
  $region2: #{up_forward.6} parent=0 // pred_check
    _
  $region3: #{up_forward.6} parent=0 // pred_check_branch
    %10 = sbr.rel (0) target = $region5
  $region4: #{up_forward.6} parent=0 // pred_region
    _
  $region5: #{up_forward.6} parent=0 // pred_fallthru
    _
  // Predicated region
  $region6: #{up_forward.6} parent=0 // pred_check
    _
  $region7: #{up_forward.6} parent=0 // pred_check_branch
    %12 = sbr.rel (0) target = $region9
  $region8: #{up_forward.6} parent=0 // pred_region
    _
  $region9: #{up_forward.6} parent=0 // pred_fallthru
    _
  %v14 = vld [vmem:[%s0] sm:$0xf]
  %v15 = vld [vmem:[%s0 + $0x4] sm:$0xf]
  %v16 = vld [vmem:[%s0 + $0x8] sm:$0xf]
  %v17 = vld [vmem:[%s0 + $0xc] sm:$0xf]
  %v18 = vld [vmem:[%s0 + $0x10] sm:$0xf]
  %v19 = vld [vmem:[%s0 + $0x14] sm:$0xf]
  %v20 = vld [vmem:[%s0 + $0x18] sm:$0xf]
  %v21 = vld [vmem:[%s0 + $0x1c] sm:$0xf]
  %v22 = vld [vmem:[%s0 + $0x20] sm:$0xf]
  %v23 = vld [vmem:[%s0 + $0x24] sm:$0xf]
  %v24 = vld [vmem:[%s0 + $0x28] sm:$0xf]
  %v25 = vld [vmem:[%s0 + $0x2c] sm:$0xf]
  %v26 = vld [vmem:[%s0 + $0x30] sm:$0xf]
  %v27 = vld [vmem:[%s0 + $0x34] sm:$0xf]
  %v28 = vld [vmem:[%s0 + $0x38] sm:$0xf]
  %v29 = vld [vmem:[%s0 + $0x3c] sm:$0xf]
  %v30 = vld [vmem:[%s0 + $0x40] sm:$0xf]
  %v31 = vld [vmem:[%s0 + $0x44] sm:$0xf]
  %v32 = vld [vmem:[%s0 + $0x48] sm:$0xf]
  %v33 = vld [vmem:[%s0 + $0x4c] sm:$0xf]
  %v34 = vld [vmem:[%s0 + $0x50] sm:$0xf]
  %v35 = vld [vmem:[%s0 + $0x54] sm:$0xf]
  %v36 = vld [vmem:[%s0 + $0x58] sm:$0xf]
  %v37 = vld [vmem:[%s0 + $0x5c] sm:$0xf]
  %v38 = vld [vmem:[%s0 + $0x60] sm:$0xf]
  %v39 = vld [vmem:[%s0 + $0x64] sm:$0xf]
  %v40 = vld [vmem:[%s0 + $0x68] sm:$0xf]
  %v41 = vld [vmem:[%s0 + $0x6c] sm:$0xf]
  %v42 = vld [vmem:[%s0 + $0x70] sm:$0xf]
  %v43 = vld [vmem:[%s0 + $0x74] sm:$0xf]
  %v44 = vld [vmem:[%s0 + $0x78] sm:$0xf]
  %v45 = vld [vmem:[%s0 + $0x7c] sm:$0xf]
  %v46 = vld [vmem:[%s0 + $0x80] sm:$0xf]
  %v47 = vld [vmem:[%s0 + $0x84] sm:$0xf]
  %v48 = vld [vmem:[%s0 + $0x88] sm:$0xf]
  %v49 = vld [vmem:[%s0 + $0x8c] sm:$0xf]
  %v50 = vld [vmem:[%s0 + $0x90] sm:$0xf]
  %v51 = vld [vmem:[%s0 + $0x94] sm:$0xf]
  %v52 = vld [vmem:[%s0 + $0x98] sm:$0xf]
  %v53 = vld [vmem:[%s0 + $0x9c] sm:$0xf]
  %v54 = vld [vmem:[%s0 + $0xa0] sm:$0xf]
  %v55 = vld [vmem:[%s0 + $0xa4] sm:$0xf]
  %v56 = vld [vmem:[%s0 + $0xa8] sm:$0xf]
  %v57 = vld [vmem:[%s0 + $0xac] sm:$0xf]
  %v58 = vld [vmem:[%s0 + $0xb0] sm:$0xf]
  %v59 = vld [vmem:[%s0 + $0xb4] sm:$0xf]
  %v60 = vld [vmem:[%s0 + $0xb8] sm:$0xf]
  %v61 = vld [vmem:[%s0 + $0xbc] sm:$0xf]
  %v62 = vld [vmem:[%s0 + $0xc0] sm:$0xf]
  %v63 = vld [vmem:[%s0 + $0xc4] sm:$0xf]
  %v64 = vld [vmem:[%s0 + $0xc8] sm:$0xf]
  %v65 = vld [vmem:[%s0 + $0xcc] sm:$0xf]
  %v66 = vld [vmem:[%s0 + $0xd0] sm:$0xf]
  %v67 = vld [vmem:[%s0 + $0xd4] sm:$0xf]
  %v68 = vld [vmem:[%s0 + $0xd8] sm:$0xf]
  %v69 = vld [vmem:[%s0 + $0xdc] sm:$0xf]
  %v70 = vld [vmem:[%s0 + $0xe0] sm:$0xf]
  %v71 = vld [vmem:[%s0 + $0xe4] sm:$0xf]
  %v72 = vld [vmem:[%s0 + $0xe8] sm:$0xf]
  %v73 = vld [vmem:[%s0 + $0xec] sm:$0xf]
  %v74 = vld [vmem:[%s0 + $0xf0] sm:$0xf]
  %v75 = vld [vmem:[%s0 + $0xf4] sm:$0xf]
  %v76 = vld [vmem:[%s0 + $0xf8] sm:$0xf]
  %v77 = vld [vmem:[%s0 + $0xfc] sm:$0xf]
  %v78 = vld [vmem:[%s1] sm:$0xf]
  %v79 = vld [vmem:[%s1 + $0x4] sm:$0xf]
  %v80 = vld [vmem:[%s1 + $0x8] sm:$0xf]
  %v81 = vld [vmem:[%s1 + $0xc] sm:$0xf]
  %v82 = vld [vmem:[%s1 + $0x10] sm:$0x3]
  %v147 = vunpack.c.l.b16 %v14
  %v148 = vunpack.c.l.b16 %v15
  %v149 = vunpack.c.l.b16 %v16
  %v150 = vunpack.c.l.b16 %v17
  %v151 = vunpack.c.l.b16 %v18
  %v152 = vunpack.c.l.b16 %v19
  %v153 = vunpack.c.l.b16 %v20
  %v154 = vunpack.c.l.b16 %v21
  %v155 = vunpack.c.l.b16 %v22
  %v156 = vunpack.c.l.b16 %v23
  %v157 = vunpack.c.l.b16 %v24
  %v158 = vunpack.c.l.b16 %v25
  %v159 = vunpack.c.l.b16 %v26
  %v160 = vunpack.c.l.b16 %v27
  %v161 = vunpack.c.l.b16 %v28
  %v162 = vunpack.c.l.b16 %v29
  %v163 = vunpack.c.l.b16 %v30
  %v164 = vunpack.c.l.b16 %v31
  %v165 = vunpack.c.l.b16 %v32
  %v166 = vunpack.c.l.b16 %v33
  %v167 = vunpack.c.l.b16 %v34
  %v168 = vunpack.c.l.b16 %v35
  %v169 = vunpack.c.l.b16 %v36
  %v170 = vunpack.c.l.b16 %v37
  %v171 = vunpack.c.l.b16 %v38
  %v172 = vunpack.c.l.b16 %v39
  %v173 = vunpack.c.l.b16 %v40
  %v174 = vunpack.c.l.b16 %v41
  %v175 = vunpack.c.l.b16 %v42
  %v176 = vunpack.c.l.b16 %v43
  %v177 = vunpack.c.l.b16 %v44
  %v178 = vunpack.c.l.b16 %v45
  %v179 = vunpack.c.l.b16 %v46
  %v180 = vunpack.c.l.b16 %v47
  %v181 = vunpack.c.l.b16 %v48
  %v182 = vunpack.c.l.b16 %v49
  %v183 = vunpack.c.l.b16 %v50
  %v184 = vunpack.c.l.b16 %v51
  %v185 = vunpack.c.l.b16 %v52
  %v186 = vunpack.c.l.b16 %v53
  %v187 = vunpack.c.l.b16 %v54
  %v188 = vunpack.c.l.b16 %v55
  %v189 = vunpack.c.l.b16 %v56
  %v190 = vunpack.c.l.b16 %v57
  %v191 = vunpack.c.l.b16 %v58
  %v192 = vunpack.c.l.b16 %v59
  %v193 = vunpack.c.l.b16 %v60
  %v194 = vunpack.c.l.b16 %v61
  %v195 = vunpack.c.l.b16 %v62
  %v196 = vunpack.c.l.b16 %v63
  %v197 = vunpack.c.l.b16 %v64
  %v198 = vunpack.c.l.b16 %v65
  %v199 = vunpack.c.l.b16 %v66
  %v200 = vunpack.c.l.b16 %v67
  %v201 = vunpack.c.l.b16 %v68
  %v202 = vunpack.c.l.b16 %v69
  %v203 = vunpack.c.l.b16 %v70
  %v204 = vunpack.c.l.b16 %v71
  %v205 = vunpack.c.l.b16 %v72
  %v206 = vunpack.c.l.b16 %v73
  %v207 = vunpack.c.l.b16 %v74
  %v208 = vunpack.c.l.b16 %v75
  %v209 = vunpack.c.l.b16 %v76
  %v210 = vunpack.c.l.b16 %v77
  %v211 = vpack.c.b16 %v148, %v147
  %v212 = vpack.c.b16 %v150, %v149
  %v213 = vpack.c.b16 %v152, %v151
  %v214 = vpack.c.b16 %v154, %v153
  %v215 = vpack.c.b16 %v156, %v155
  %v216 = vpack.c.b16 %v158, %v157
  %v217 = vpack.c.b16 %v160, %v159
  %v218 = vpack.c.b16 %v162, %v161
  %v219 = vpack.c.b16 %v164, %v163
  %v220 = vpack.c.b16 %v166, %v165
  %v221 = vpack.c.b16 %v168, %v167
  %v222 = vpack.c.b16 %v170, %v169
  %v223 = vpack.c.b16 %v172, %v171
  %v224 = vpack.c.b16 %v174, %v173
  %v225 = vpack.c.b16 %v176, %v175
  %v226 = vpack.c.b16 %v178, %v177
  %v227 = vpack.c.b16 %v180, %v179
  %v228 = vpack.c.b16 %v182, %v181
  %v229 = vpack.c.b16 %v184, %v183
  %v230 = vpack.c.b16 %v186, %v185
  %v231 = vpack.c.b16 %v188, %v187
  %v232 = vpack.c.b16 %v190, %v189
  %v233 = vpack.c.b16 %v192, %v191
  %v234 = vpack.c.b16 %v194, %v193
  %v235 = vpack.c.b16 %v196, %v195
  %v236 = vpack.c.b16 %v198, %v197
  %v237 = vpack.c.b16 %v200, %v199
  %v238 = vpack.c.b16 %v202, %v201
  %v239 = vpack.c.b16 %v204, %v203
  %v240 = vpack.c.b16 %v206, %v205
  %v241 = vpack.c.b16 %v208, %v207
  %v242 = vpack.c.b16 %v210, %v209
  %v248 = vunpack.c.l.b16 %v78
  %v249 = vunpack.c.l.b16 %v79
  %v250 = vunpack.c.l.b16 %v80
  %v251 = vunpack.c.l.b16 %v81
  %v252 = vunpack.c.l.b16 %v82
  %v253 = vpack.c.b16 %v249, %v248
  %v254 = vpack.c.b16 %v251, %v250
  %v255 = vpack.c.b16 %v252, %v252
  %vm258 = vcmask 293888
  %v260 = vsel %vm258, %v211, 0
  %v263 = vsel %vm258, %v212, 0
  %v266 = vsel %vm258, %v213, 0
  %v269 = vsel %vm258, %v214, 0
  %v272 = vsel %vm258, %v215, 0
  %v275 = vsel %vm258, %v216, 0
  %v278 = vsel %vm258, %v217, 0
  %v281 = vsel %vm258, %v218, 0
  %v284 = vsel %vm258, %v219, 0
  %v287 = vsel %vm258, %v220, 0
  %v290 = vsel %vm258, %v221, 0
  %v293 = vsel %vm258, %v222, 0
  %v296 = vsel %vm258, %v223, 0
  %v299 = vsel %vm258, %v224, 0
  %v302 = vsel %vm258, %v225, 0
  %v305 = vsel %vm258, %v226, 0
  %v308 = vsel %vm258, %v227, 0
  %v311 = vsel %vm258, %v228, 0
  %v314 = vsel %vm258, %v229, 0
  %v317 = vsel %vm258, %v230, 0
  %v320 = vsel %vm258, %v231, 0
  %v323 = vsel %vm258, %v232, 0
  %v326 = vsel %vm258, %v233, 0
  %v329 = vsel %vm258, %v234, 0
  %v332 = vsel %vm258, %v235, 0
  %v335 = vsel %vm258, %v236, 0
  %v338 = vsel %vm258, %v237, 0
  %v341 = vsel %vm258, %v238, 0
  %v344 = vsel %vm258, %v239, 0
  %v347 = vsel %vm258, %v240, 0
  %v350 = vsel %vm258, %v241, 0
  %v353 = vsel %vm258, %v242, 0
  %vm355 = vcmask 1041408
  %v357 = vsel %vm355, %v255, 0
  %359 = vmatpush.bf16.msra.mxu0 0
  %360 = vmatpush.bf16.msra.mxu0 0
  %361 = vmatpush.bf16.msra.mxu0 0
  %362 = vmatpush.bf16.msra.mxu0 0
  %363 = vmatpush.bf16.msra.mxu0 0
  %364 = vmatpush.bf16.msra.mxu0 %v357
  %365 = vmatpush.bf16.msra.mxu0 %v254
  %366 = vmatpush.bf16.msra.mxu0 %v253
  %367 = vmatmul.bf16.gmra.mxu0 %v260
  %v368 = vpop.f32.mrf.mxu0
  %v369 = vadd.f32 0.0, %v368
  %v370 = vpop.f32.mrf.mxu0
  %v371 = vadd.f32 0.0, %v370
  %372 = vmatmul.bf16.gmra.mxu0 %v263
  %v373 = vpop.f32.mrf.mxu0
  %v374 = vadd.f32 0.0, %v373
  %v375 = vpop.f32.mrf.mxu0
  %v376 = vadd.f32 0.0, %v375
  %377 = vmatmul.bf16.gmra.mxu0 %v266
  %v378 = vpop.f32.mrf.mxu0
  %v379 = vadd.f32 0.0, %v378
  %v380 = vpop.f32.mrf.mxu0
  %v381 = vadd.f32 0.0, %v380
  %382 = vmatmul.bf16.gmra.mxu0 %v269
  %v383 = vpop.f32.mrf.mxu0
  %v384 = vadd.f32 0.0, %v383
  %v385 = vpop.f32.mrf.mxu0
  %v386 = vadd.f32 0.0, %v385
  %387 = vmatmul.bf16.gmra.mxu0 %v272
  %v388 = vpop.f32.mrf.mxu0
  %v389 = vadd.f32 0.0, %v388
  %v390 = vpop.f32.mrf.mxu0
  %v391 = vadd.f32 0.0, %v390
  %392 = vmatmul.bf16.gmra.mxu0 %v275
  %v393 = vpop.f32.mrf.mxu0
  %v394 = vadd.f32 0.0, %v393
  %v395 = vpop.f32.mrf.mxu0
  %v396 = vadd.f32 0.0, %v395
  %397 = vmatmul.bf16.gmra.mxu0 %v278
  %v398 = vpop.f32.mrf.mxu0
  %v399 = vadd.f32 0.0, %v398
  %v400 = vpop.f32.mrf.mxu0
  %v401 = vadd.f32 0.0, %v400
  %402 = vmatmul.bf16.gmra.mxu0 %v281
  %v403 = vpop.f32.mrf.mxu0
  %v404 = vadd.f32 0.0, %v403
  %v405 = vpop.f32.mrf.mxu0
  %v406 = vadd.f32 0.0, %v405
  %407 = vmatmul.bf16.gmra.mxu0 %v284
  %v408 = vpop.f32.mrf.mxu0
  %v409 = vadd.f32 0.0, %v408
  %v410 = vpop.f32.mrf.mxu0
  %v411 = vadd.f32 0.0, %v410
  %412 = vmatmul.bf16.gmra.mxu0 %v287
  %v413 = vpop.f32.mrf.mxu0
  %v414 = vadd.f32 0.0, %v413
  %v415 = vpop.f32.mrf.mxu0
  %v416 = vadd.f32 0.0, %v415
  %417 = vmatmul.bf16.gmra.mxu0 %v290
  %v418 = vpop.f32.mrf.mxu0
  %v419 = vadd.f32 0.0, %v418
  %v420 = vpop.f32.mrf.mxu0
  %v421 = vadd.f32 0.0, %v420
  %422 = vmatmul.bf16.gmra.mxu0 %v293
  %v423 = vpop.f32.mrf.mxu0
  %v424 = vadd.f32 0.0, %v423
  %v425 = vpop.f32.mrf.mxu0
  %v426 = vadd.f32 0.0, %v425
  %427 = vmatmul.bf16.gmra.mxu0 %v296
  %v428 = vpop.f32.mrf.mxu0
  %v429 = vadd.f32 0.0, %v428
  %v430 = vpop.f32.mrf.mxu0
  %v431 = vadd.f32 0.0, %v430
  %432 = vmatmul.bf16.gmra.mxu0 %v299
  %v433 = vpop.f32.mrf.mxu0
  %v434 = vadd.f32 0.0, %v433
  %v435 = vpop.f32.mrf.mxu0
  %v436 = vadd.f32 0.0, %v435
  %437 = vmatmul.bf16.gmra.mxu0 %v302
  %v438 = vpop.f32.mrf.mxu0
  %v439 = vadd.f32 0.0, %v438
  %v440 = vpop.f32.mrf.mxu0
  %v441 = vadd.f32 0.0, %v440
  %442 = vmatmul.bf16.gmra.mxu0 %v305
  %v443 = vpop.f32.mrf.mxu0
  %v444 = vadd.f32 0.0, %v443
  %v445 = vpop.f32.mrf.mxu0
  %v446 = vadd.f32 0.0, %v445
  %447 = vmatmul.bf16.gmra.mxu0 %v308
  %v448 = vpop.f32.mrf.mxu0
  %v449 = vadd.f32 0.0, %v448
  %v450 = vpop.f32.mrf.mxu0
  %v451 = vadd.f32 0.0, %v450
  %452 = vmatmul.bf16.gmra.mxu0 %v311
  %v453 = vpop.f32.mrf.mxu0
  %v454 = vadd.f32 0.0, %v453
  %v455 = vpop.f32.mrf.mxu0
  %v456 = vadd.f32 0.0, %v455
  %457 = vmatmul.bf16.gmra.mxu0 %v314
  %v458 = vpop.f32.mrf.mxu0
  %v459 = vadd.f32 0.0, %v458
  %v460 = vpop.f32.mrf.mxu0
  %v461 = vadd.f32 0.0, %v460
  %462 = vmatmul.bf16.gmra.mxu0 %v317
  %v463 = vpop.f32.mrf.mxu0
  %v464 = vadd.f32 0.0, %v463
  %v465 = vpop.f32.mrf.mxu0
  %v466 = vadd.f32 0.0, %v465
  %467 = vmatmul.bf16.gmra.mxu0 %v320
  %v468 = vpop.f32.mrf.mxu0
  %v469 = vadd.f32 0.0, %v468
  %v470 = vpop.f32.mrf.mxu0
  %v471 = vadd.f32 0.0, %v470
  %472 = vmatmul.bf16.gmra.mxu0 %v323
  %v473 = vpop.f32.mrf.mxu0
  %v474 = vadd.f32 0.0, %v473
  %v475 = vpop.f32.mrf.mxu0
  %v476 = vadd.f32 0.0, %v475
  %477 = vmatmul.bf16.gmra.mxu0 %v326
  %v478 = vpop.f32.mrf.mxu0
  %v479 = vadd.f32 0.0, %v478
  %v480 = vpop.f32.mrf.mxu0
  %v481 = vadd.f32 0.0, %v480
  %482 = vmatmul.bf16.gmra.mxu0 %v329
  %v483 = vpop.f32.mrf.mxu0
  %v484 = vadd.f32 0.0, %v483
  %v485 = vpop.f32.mrf.mxu0
  %v486 = vadd.f32 0.0, %v485
  %487 = vmatmul.bf16.gmra.mxu0 %v332
  %v488 = vpop.f32.mrf.mxu0
  %v489 = vadd.f32 0.0, %v488
  %v490 = vpop.f32.mrf.mxu0
  %v491 = vadd.f32 0.0, %v490
  %492 = vmatmul.bf16.gmra.mxu0 %v335
  %v493 = vpop.f32.mrf.mxu0
  %v494 = vadd.f32 0.0, %v493
  %v495 = vpop.f32.mrf.mxu0
  %v496 = vadd.f32 0.0, %v495
  %497 = vmatmul.bf16.gmra.mxu0 %v338
  %v498 = vpop.f32.mrf.mxu0
  %v499 = vadd.f32 0.0, %v498
  %v500 = vpop.f32.mrf.mxu0
  %v501 = vadd.f32 0.0, %v500
  %502 = vmatmul.bf16.gmra.mxu0 %v341
  %v503 = vpop.f32.mrf.mxu0
  %v504 = vadd.f32 0.0, %v503
  %v505 = vpop.f32.mrf.mxu0
  %v506 = vadd.f32 0.0, %v505
  %507 = vmatmul.bf16.gmra.mxu0 %v344
  %v508 = vpop.f32.mrf.mxu0
  %v509 = vadd.f32 0.0, %v508
  %v510 = vpop.f32.mrf.mxu0
  %v511 = vadd.f32 0.0, %v510
  %512 = vmatmul.bf16.gmra.mxu0 %v347
  %v513 = vpop.f32.mrf.mxu0
  %v514 = vadd.f32 0.0, %v513
  %v515 = vpop.f32.mrf.mxu0
  %v516 = vadd.f32 0.0, %v515
  %517 = vmatmul.bf16.gmra.mxu0 %v350
  %v518 = vpop.f32.mrf.mxu0
  %v519 = vadd.f32 0.0, %v518
  %v520 = vpop.f32.mrf.mxu0
  %v521 = vadd.f32 0.0, %v520
  %522 = vmatmul.bf16.gmra.mxu0 %v353
  %v523 = vpop.f32.mrf.mxu0
  %v524 = vadd.f32 0.0, %v523
  %v525 = vpop.f32.mrf.mxu0
  %v526 = vadd.f32 0.0, %v525
  %527 = vdwg.mxu0
  %528 = vst [vmem:[%s2] sm:$0xff] %v369
  %529 = vst [vmem:[%s2 + $0x8] sm:$0xff] %v371
  %530 = vst [vmem:[%s2 + $0x10] sm:$0xff] %v374
  %531 = vst [vmem:[%s2 + $0x18] sm:$0xff] %v376
  %532 = vst [vmem:[%s2 + $0x20] sm:$0xff] %v379
  %533 = vst [vmem:[%s2 + $0x28] sm:$0xff] %v381
  %534 = vst [vmem:[%s2 + $0x30] sm:$0xff] %v384
  %535 = vst [vmem:[%s2 + $0x38] sm:$0xff] %v386
  %536 = vst [vmem:[%s2 + $0x40] sm:$0xff] %v389
  %537 = vst [vmem:[%s2 + $0x48] sm:$0xff] %v391
  %538 = vst [vmem:[%s2 + $0x50] sm:$0xff] %v394
  %539 = vst [vmem:[%s2 + $0x58] sm:$0xff] %v396
  %540 = vst [vmem:[%s2 + $0x60] sm:$0xff] %v399
  %541 = vst [vmem:[%s2 + $0x68] sm:$0xff] %v401
  %542 = vst [vmem:[%s2 + $0x70] sm:$0xff] %v404
  %543 = vst [vmem:[%s2 + $0x78] sm:$0xff] %v406
  %544 = vst [vmem:[%s2 + $0x80] sm:$0xff] %v409
  %545 = vst [vmem:[%s2 + $0x88] sm:$0xff] %v411
  %546 = vst [vmem:[%s2 + $0x90] sm:$0xff] %v414
  %547 = vst [vmem:[%s2 + $0x98] sm:$0xff] %v416
  %548 = vst [vmem:[%s2 + $0xa0] sm:$0xff] %v419
  %549 = vst [vmem:[%s2 + $0xa8] sm:$0xff] %v421
  %550 = vst [vmem:[%s2 + $0xb0] sm:$0xff] %v424
  %551 = vst [vmem:[%s2 + $0xb8] sm:$0xff] %v426
  %552 = vst [vmem:[%s2 + $0xc0] sm:$0xff] %v429
  %553 = vst [vmem:[%s2 + $0xc8] sm:$0xff] %v431
  %554 = vst [vmem:[%s2 + $0xd0] sm:$0xff] %v434
  %555 = vst [vmem:[%s2 + $0xd8] sm:$0xff] %v436
  %556 = vst [vmem:[%s2 + $0xe0] sm:$0xff] %v439
  %557 = vst [vmem:[%s2 + $0xe8] sm:$0xff] %v441
  %558 = vst [vmem:[%s2 + $0xf0] sm:$0xff] %v444
  %559 = vst [vmem:[%s2 + $0xf8] sm:$0xff] %v446
  %560 = vst [vmem:[%s2 + $0x100] sm:$0xff] %v449
  %561 = vst [vmem:[%s2 + $0x108] sm:$0xff] %v451
  %562 = vst [vmem:[%s2 + $0x110] sm:$0xff] %v454
  %563 = vst [vmem:[%s2 + $0x118] sm:$0xff] %v456
  %564 = vst [vmem:[%s2 + $0x120] sm:$0xff] %v459
  %565 = vst [vmem:[%s2 + $0x128] sm:$0xff] %v461
  %566 = vst [vmem:[%s2 + $0x130] sm:$0xff] %v464
  %567 = vst [vmem:[%s2 + $0x138] sm:$0xff] %v466
  %568 = vst [vmem:[%s2 + $0x140] sm:$0xff] %v469
  %569 = vst [vmem:[%s2 + $0x148] sm:$0xff] %v471
  %570 = vst [vmem:[%s2 + $0x150] sm:$0xff] %v474
  %571 = vst [vmem:[%s2 + $0x158] sm:$0xff] %v476
  %572 = vst [vmem:[%s2 + $0x160] sm:$0xff] %v479
  %573 = vst [vmem:[%s2 + $0x168] sm:$0xff] %v481
  %574 = vst [vmem:[%s2 + $0x170] sm:$0xff] %v484
  %575 = vst [vmem:[%s2 + $0x178] sm:$0xff] %v486
  %576 = vst [vmem:[%s2 + $0x180] sm:$0xff] %v489
  %577 = vst [vmem:[%s2 + $0x188] sm:$0xff] %v491
  %578 = vst [vmem:[%s2 + $0x190] sm:$0xff] %v494
  %579 = vst [vmem:[%s2 + $0x198] sm:$0xff] %v496
  %580 = vst [vmem:[%s2 + $0x1a0] sm:$0xff] %v499
  %581 = vst [vmem:[%s2 + $0x1a8] sm:$0xff] %v501
  %582 = vst [vmem:[%s2 + $0x1b0] sm:$0xff] %v504
  %583 = vst [vmem:[%s2 + $0x1b8] sm:$0xff] %v506
  %584 = vst [vmem:[%s2 + $0x1c0] sm:$0xff] %v509
  %585 = vst [vmem:[%s2 + $0x1c8] sm:$0xff] %v511
  %586 = vst [vmem:[%s2 + $0x1d0] sm:$0xff] %v514
  %587 = vst [vmem:[%s2 + $0x1d8] sm:$0xff] %v516
  %588 = vst [vmem:[%s2 + $0x1e0] sm:$0xff] %v519
  %589 = vst [vmem:[%s2 + $0x1e8] sm:$0xff] %v521
  %590 = vst [vmem:[%s2 + $0x1f0] sm:$0xff] %v524
  %591 = vst [vmem:[%s2 + $0x1f8] sm:$0xff] %v526
  %v592 = vadd.f32 %v369, %v371
  %v593 = vadd.f32 %v592, %v374
  %v594 = vadd.f32 %v593, %v376
  %v595 = vadd.f32 %v594, %v379
  %v596 = vadd.f32 %v595, %v381
  %v597 = vadd.f32 %v596, %v384
  %v598 = vadd.f32 %v597, %v386
  %v599 = vadd.f32 %v598, %v389
  %v600 = vadd.f32 %v599, %v391
  %v601 = vadd.f32 %v600, %v394
  %v602 = vadd.f32 %v601, %v396
  %v603 = vadd.f32 %v602, %v399
  %v604 = vadd.f32 %v603, %v401
  %v605 = vadd.f32 %v604, %v404
  %v606 = vadd.f32 %v605, %v406
  %v607 = vadd.f32 %v606, %v409
  %v608 = vadd.f32 %v607, %v411
  %v609 = vadd.f32 %v608, %v414
  %v610 = vadd.f32 %v609, %v416
  %v611 = vadd.f32 %v610, %v419
  %v612 = vadd.f32 %v611, %v421
  %v613 = vadd.f32 %v612, %v424
  %v614 = vadd.f32 %v613, %v426
  %v615 = vadd.f32 %v614, %v429
  %v616 = vadd.f32 %v615, %v431
  %v617 = vadd.f32 %v616, %v434
  %v618 = vadd.f32 %v617, %v436
  %v619 = vadd.f32 %v618, %v439
  %v620 = vadd.f32 %v619, %v441
  %v621 = vadd.f32 %v620, %v444
  %v622 = vadd.f32 %v621, %v446
  %v623 = vadd.f32 %v622, %v449
  %v624 = vadd.f32 %v623, %v451
  %v625 = vadd.f32 %v624, %v454
  %v626 = vadd.f32 %v625, %v456
  %v627 = vadd.f32 %v626, %v459
  %v628 = vadd.f32 %v627, %v461
  %v629 = vadd.f32 %v628, %v464
  %v630 = vadd.f32 %v629, %v466
  %v631 = vadd.f32 %v630, %v469
  %v632 = vadd.f32 %v631, %v471
  %v633 = vadd.f32 %v632, %v474
  %v634 = vadd.f32 %v633, %v476
  %v635 = vadd.f32 %v634, %v479
  %v636 = vadd.f32 %v635, %v481
  %v637 = vadd.f32 %v636, %v484
  %v638 = vadd.f32 %v637, %v486
  %v639 = vadd.f32 %v638, %v489
  %v640 = vadd.f32 %v639, %v491
  %v641 = vadd.f32 %v640, %v494
  %v642 = vadd.f32 %v641, %v496
  %v643 = vadd.f32 %v642, %v499
  %v644 = vadd.f32 %v643, %v501
  %v645 = vadd.f32 %v644, %v504
  %v646 = vadd.f32 %v645, %v506
  %v647 = vadd.f32 %v646, %v509
  %v648 = vadd.f32 %v647, %v511
  %v649 = vadd.f32 %v648, %v514
  %v650 = vadd.f32 %v649, %v516
  %v651 = vadd.f32 %v650, %v519
  %v652 = vadd.f32 %v651, %v521
  %v653 = vadd.f32 %v652, %v524
  %v654 = vadd.f32 %v653, %v526
  %v655 = vrot.slane %v654, 4
  %v656 = vadd.f32 %v654, %v655
  %v657 = vrot.slane %v656, 2
  %v658 = vadd.f32 %v656, %v657
  %v659 = vrot.slane %v658, 1
  %v660 = vadd.f32 %v658, %v659
  %661 = vst [vmem:[%s3] sm:$0x1] %v660
  %v662 = vmul.f32 %v369, %v369
  %v663 = vmul.f32 %v371, %v371
  %v664 = vmul.f32 %v374, %v374
  %v665 = vmul.f32 %v376, %v376
  %v666 = vmul.f32 %v379, %v379
  %v667 = vmul.f32 %v381, %v381
  %v668 = vmul.f32 %v384, %v384
  %v669 = vmul.f32 %v386, %v386
  %v670 = vmul.f32 %v389, %v389
  %v671 = vmul.f32 %v391, %v391
  %v672 = vmul.f32 %v394, %v394
  %v673 = vmul.f32 %v396, %v396
  %v674 = vmul.f32 %v399, %v399
  %v675 = vmul.f32 %v401, %v401
  %v676 = vmul.f32 %v404, %v404
  %v677 = vmul.f32 %v406, %v406
  %v678 = vmul.f32 %v409, %v409
  %v679 = vmul.f32 %v411, %v411
  %v680 = vmul.f32 %v414, %v414
  %v681 = vmul.f32 %v416, %v416
  %v682 = vmul.f32 %v419, %v419
  %v683 = vmul.f32 %v421, %v421
  %v684 = vmul.f32 %v424, %v424
  %v685 = vmul.f32 %v426, %v426
  %v686 = vmul.f32 %v429, %v429
  %v687 = vmul.f32 %v431, %v431
  %v688 = vmul.f32 %v434, %v434
  %v689 = vmul.f32 %v436, %v436
  %v690 = vmul.f32 %v439, %v439
  %v691 = vmul.f32 %v441, %v441
  %v692 = vmul.f32 %v444, %v444
  %v693 = vmul.f32 %v446, %v446
  %v694 = vmul.f32 %v449, %v449
  %v695 = vmul.f32 %v451, %v451
  %v696 = vmul.f32 %v454, %v454
  %v697 = vmul.f32 %v456, %v456
  %v698 = vmul.f32 %v459, %v459
  %v699 = vmul.f32 %v461, %v461
  %v700 = vmul.f32 %v464, %v464
  %v701 = vmul.f32 %v466, %v466
  %v702 = vmul.f32 %v469, %v469
  %v703 = vmul.f32 %v471, %v471
  %v704 = vmul.f32 %v474, %v474
  %v705 = vmul.f32 %v476, %v476
  %v706 = vmul.f32 %v479, %v479
  %v707 = vmul.f32 %v481, %v481
  %v708 = vmul.f32 %v484, %v484
  %v709 = vmul.f32 %v486, %v486
  %v710 = vmul.f32 %v489, %v489
  %v711 = vmul.f32 %v491, %v491
  %v712 = vmul.f32 %v494, %v494
  %v713 = vmul.f32 %v496, %v496
  %v714 = vmul.f32 %v499, %v499
  %v715 = vmul.f32 %v501, %v501
  %v716 = vmul.f32 %v504, %v504
  %v717 = vmul.f32 %v506, %v506
  %v718 = vmul.f32 %v509, %v509
  %v719 = vmul.f32 %v511, %v511
  %v720 = vmul.f32 %v514, %v514
  %v721 = vmul.f32 %v516, %v516
  %v722 = vmul.f32 %v519, %v519
  %v723 = vmul.f32 %v521, %v521
  %v724 = vmul.f32 %v524, %v524
  %v725 = vmul.f32 %v526, %v526
  %v726 = vadd.f32 %v662, %v663
  %v727 = vadd.f32 %v726, %v664
  %v728 = vadd.f32 %v727, %v665
  %v729 = vadd.f32 %v728, %v666
  %v730 = vadd.f32 %v729, %v667
  %v731 = vadd.f32 %v730, %v668
  %v732 = vadd.f32 %v731, %v669
  %v733 = vadd.f32 %v732, %v670
  %v734 = vadd.f32 %v733, %v671
  %v735 = vadd.f32 %v734, %v672
  %v736 = vadd.f32 %v735, %v673
  %v737 = vadd.f32 %v736, %v674
  %v738 = vadd.f32 %v737, %v675
  %v739 = vadd.f32 %v738, %v676
  %v740 = vadd.f32 %v739, %v677
  %v741 = vadd.f32 %v740, %v678
  %v742 = vadd.f32 %v741, %v679
  %v743 = vadd.f32 %v742, %v680
  %v744 = vadd.f32 %v743, %v681
  %v745 = vadd.f32 %v744, %v682
  %v746 = vadd.f32 %v745, %v683
  %v747 = vadd.f32 %v746, %v684
  %v748 = vadd.f32 %v747, %v685
  %v749 = vadd.f32 %v748, %v686
  %v750 = vadd.f32 %v749, %v687
  %v751 = vadd.f32 %v750, %v688
  %v752 = vadd.f32 %v751, %v689
  %v753 = vadd.f32 %v752, %v690
  %v754 = vadd.f32 %v753, %v691
  %v755 = vadd.f32 %v754, %v692
  %v756 = vadd.f32 %v755, %v693
  %v757 = vadd.f32 %v756, %v694
  %v758 = vadd.f32 %v757, %v695
  %v759 = vadd.f32 %v758, %v696
  %v760 = vadd.f32 %v759, %v697
  %v761 = vadd.f32 %v760, %v698
  %v762 = vadd.f32 %v761, %v699
  %v763 = vadd.f32 %v762, %v700
  %v764 = vadd.f32 %v763, %v701
  %v765 = vadd.f32 %v764, %v702
  %v766 = vadd.f32 %v765, %v703
  %v767 = vadd.f32 %v766, %v704
  %v768 = vadd.f32 %v767, %v705
  %v769 = vadd.f32 %v768, %v706
  %v770 = vadd.f32 %v769, %v707
  %v771 = vadd.f32 %v770, %v708
  %v772 = vadd.f32 %v771, %v709
  %v773 = vadd.f32 %v772, %v710
  %v774 = vadd.f32 %v773, %v711
  %v775 = vadd.f32 %v774, %v712
  %v776 = vadd.f32 %v775, %v713
  %v777 = vadd.f32 %v776, %v714
  %v778 = vadd.f32 %v777, %v715
  %v779 = vadd.f32 %v778, %v716
  %v780 = vadd.f32 %v779, %v717
  %v781 = vadd.f32 %v780, %v718
  %v782 = vadd.f32 %v781, %v719
  %v783 = vadd.f32 %v782, %v720
  %v784 = vadd.f32 %v783, %v721
  %v785 = vadd.f32 %v784, %v722
  %v786 = vadd.f32 %v785, %v723
  %v787 = vadd.f32 %v786, %v724
  %v788 = vadd.f32 %v787, %v725
  %v789 = vrot.slane %v788, 4
  %v790 = vadd.f32 %v788, %v789
  %v791 = vrot.slane %v790, 2
  %v792 = vadd.f32 %v790, %v791
  %v793 = vrot.slane %v792, 1
  %v794 = vadd.f32 %v792, %v793
  %795 = vst [vmem:[%s3 + $0x1] sm:$0x1] %v794
  // Predicated region
  $region10: #{up_forward.6} parent=0 // pred_check
    _
  $region11: #{up_forward.6} parent=0 // pred_check_branch
    %797 = sbr.rel (0) target = $region13
  $region12: #{up_forward.6} parent=0 // pred_region
    _
  $region13: #{up_forward.6} parent=0 // pred_fallthru
    _
  // Predicated region
  $region14: #{up_forward.6} parent=0 // pred_check
    _
  $region15: #{up_forward.6} parent=0 // pred_check_branch
    %799 = sbr.rel (0) target = $region17
  $region16: #{up_forward.6} parent=0 // pred_region
    _
  $region17: #{up_forward.6} parent=0 // pred_fallthru
    _
  // Predicated region
  $region18: #{up_forward.6} parent=0 // pred_check
    _
  $region19: #{up_forward.6} parent=0 // pred_check_branch
    %801 = sbr.rel (0) target = $region21
  $region20: #{up_forward.6} parent=0 // pred_region
    _
  $region21: #{up_forward.6} parent=0 // pred_fallthru
    _
  // Predicated region
  $region22: #{up_forward.6} parent=0 // pred_check
    _
  $region23: #{up_forward.6} parent=0 // pred_check_branch
    %803 = sbr.rel (0) target = $region25
  $region24: #{up_forward.6} parent=0 // pred_region
    _
  $region25: #{up_forward.6} parent=0 // pred_fallthru
    _

// kernel: up_forward.7
$region0: #{up_forward.7}
  #allocation0 [shape = 'u32[]', space=smem, size = 0x4, offset = 0x4, fixed_abs, tag = 'smem constant byte address 0x4 - core index']
  #allocation1 [shape = 'u32[72,128]{1,0:T(1,128)}', space=vmem, size = 0x9000, scoped, tag = 'internal scratch']
  %s0 = inlined_call_operand.vmem [shape: f32[512,128], index: 0, kind: input, shape index: {}]
  %s1 = inlined_call_operand.vmem [shape: f32[1,128], index: 1, kind: input, shape index: {}]
  %s2 = inlined_call_operand.vmem [shape: f32[1,128], index: 2, kind: input, shape index: {}]
  %s3 = inlined_call_operand.vmem [shape: f32[512,128], index: 3, kind: output, shape index: {}]
  %s4 = sld [smem:[#allocation0]]
  $region22: #{up_forward.7} parent=0
    _
  %s6 = ssub.s32 1, %s4
  %s7 = scalar_select 0, %s6, %s4
  // Predicated region
  $region2: #{up_forward.7} parent=0 // pred_check
    _
  $region3: #{up_forward.7} parent=0 // pred_check_branch
    %9 = sbr.rel (0) target = $region5
  $region4: #{up_forward.7} parent=0 // pred_region
    _
  $region5: #{up_forward.7} parent=0 // pred_fallthru
    _
  // Predicated region
  $region6: #{up_forward.7} parent=0 // pred_check
    _
  $region7: #{up_forward.7} parent=0 // pred_check_branch
    %11 = sbr.rel (0) target = $region9
  $region8: #{up_forward.7} parent=0 // pred_region
    _
  $region9: #{up_forward.7} parent=0 // pred_fallthru
    _
  // Predicated region
  $region10: #{up_forward.7} parent=0 // pred_check
    _
  $region11: #{up_forward.7} parent=0 // pred_check_branch
    %13 = sbr.rel (0) target = $region13
  $region12: #{up_forward.7} parent=0 // pred_region
    _
  $region13: #{up_forward.7} parent=0 // pred_fallthru
    _
  %v14 = vld [vmem:[%s0] sm:$0xff]
  %v15 = vld [vmem:[%s0 + $0x8] sm:$0xff]
  %v16 = vld [vmem:[%s0 + $0x10] sm:$0xff]
  %v17 = vld [vmem:[%s0 + $0x18] sm:$0xff]
  %v18 = vld [vmem:[%s0 + $0x20] sm:$0xff]
  %v19 = vld [vmem:[%s0 + $0x28] sm:$0xff]
  %v20 = vld [vmem:[%s0 + $0x30] sm:$0xff]
  %v21 = vld [vmem:[%s0 + $0x38] sm:$0xff]
  %v22 = vld [vmem:[%s0 + $0x40] sm:$0xff]
  %v23 = vld [vmem:[%s0 + $0x48] sm:$0xff]
  %v24 = vld [vmem:[%s0 + $0x50] sm:$0xff]
  %v25 = vld [vmem:[%s0 + $0x58] sm:$0xff]
  %v26 = vld [vmem:[%s0 + $0x60] sm:$0xff]
  %v27 = vld [vmem:[%s0 + $0x68] sm:$0xff]
  %v28 = vld [vmem:[%s0 + $0x70] sm:$0xff]
  %v29 = vld [vmem:[%s0 + $0x78] sm:$0xff]
  %v30 = vld [vmem:[%s0 + $0x80] sm:$0xff]
  %v31 = vld [vmem:[%s0 + $0x88] sm:$0xff]
  %v32 = vld [vmem:[%s0 + $0x90] sm:$0xff]
  %v33 = vld [vmem:[%s0 + $0x98] sm:$0xff]
  %v34 = vld [vmem:[%s0 + $0xa0] sm:$0xff]
  %v35 = vld [vmem:[%s0 + $0xa8] sm:$0xff]
  %v36 = vld [vmem:[%s0 + $0xb0] sm:$0xff]
  %v37 = vld [vmem:[%s0 + $0xb8] sm:$0xff]
  %v38 = vld [vmem:[%s0 + $0xc0] sm:$0xff]
  %v39 = vld [vmem:[%s0 + $0xc8] sm:$0xff]
  %v40 = vld [vmem:[%s0 + $0xd0] sm:$0xff]
  %v41 = vld [vmem:[%s0 + $0xd8] sm:$0xff]
  %v42 = vld [vmem:[%s0 + $0xe0] sm:$0xff]
  %v43 = vld [vmem:[%s0 + $0xe8] sm:$0xff]
  %v44 = vld [vmem:[%s0 + $0xf0] sm:$0xff]
  %v45 = vld [vmem:[%s0 + $0xf8] sm:$0xff]
  %v46 = vld [vmem:[%s0 + $0x100] sm:$0xff]
  %v47 = vld [vmem:[%s0 + $0x108] sm:$0xff]
  %v48 = vld [vmem:[%s0 + $0x110] sm:$0xff]
  %v49 = vld [vmem:[%s0 + $0x118] sm:$0xff]
  %v50 = vld [vmem:[%s0 + $0x120] sm:$0xff]
  %v51 = vld [vmem:[%s0 + $0x128] sm:$0xff]
  %v52 = vld [vmem:[%s0 + $0x130] sm:$0xff]
  %v53 = vld [vmem:[%s0 + $0x138] sm:$0xff]
  %v54 = vld [vmem:[%s0 + $0x140] sm:$0xff]
  %v55 = vld [vmem:[%s0 + $0x148] sm:$0xff]
  %v56 = vld [vmem:[%s0 + $0x150] sm:$0xff]
  %v57 = vld [vmem:[%s0 + $0x158] sm:$0xff]
  %v58 = vld [vmem:[%s0 + $0x160] sm:$0xff]
  %v59 = vld [vmem:[%s0 + $0x168] sm:$0xff]
  %v60 = vld [vmem:[%s0 + $0x170] sm:$0xff]
  %v61 = vld [vmem:[%s0 + $0x178] sm:$0xff]
  %v62 = vld [vmem:[%s0 + $0x180] sm:$0xff]
  %v63 = vld [vmem:[%s0 + $0x188] sm:$0xff]
  %v64 = vld [vmem:[%s0 + $0x190] sm:$0xff]
  %v65 = vld [vmem:[%s0 + $0x198] sm:$0xff]
  %v66 = vld [vmem:[%s0 + $0x1a0] sm:$0xff]
  %v67 = vld [vmem:[%s0 + $0x1a8] sm:$0xff]
  %v68 = vld [vmem:[%s0 + $0x1b0] sm:$0xff]
  %v69 = vld [vmem:[%s0 + $0x1b8] sm:$0xff]
  %v70 = vld [vmem:[%s0 + $0x1c0] sm:$0xff]
  %v71 = vld [vmem:[%s0 + $0x1c8] sm:$0xff]
  %v72 = vld [vmem:[%s0 + $0x1d0] sm:$0xff]
  %v73 = vld [vmem:[%s0 + $0x1d8] sm:$0xff]
  %v74 = vld [vmem:[%s0 + $0x1e0] sm:$0xff]
  %v75 = vld [vmem:[%s0 + $0x1e8] sm:$0xff]
  %v76 = vld [vmem:[%s0 + $0x1f0] sm:$0xff]
  %v77 = vld [vmem:[%s0 + $0x1f8] sm:$0xff]
  %v78 = vld [vmem:[%s1] sm:$0x1]
  %v80 = vperm.slane %v78, 0
  %v82 = vmul.f32 %v14, %v80
  %v83 = vmul.f32 %v15, %v80
  %v84 = vmul.f32 %v16, %v80
  %v85 = vmul.f32 %v17, %v80
  %v86 = vmul.f32 %v18, %v80
  %v87 = vmul.f32 %v19, %v80
  %v88 = vmul.f32 %v20, %v80
  %v89 = vmul.f32 %v21, %v80
  %v90 = vmul.f32 %v22, %v80
  %v91 = vmul.f32 %v23, %v80
  %v92 = vmul.f32 %v24, %v80
  %v93 = vmul.f32 %v25, %v80
  %v94 = vmul.f32 %v26, %v80
  %v95 = vmul.f32 %v27, %v80
  %v96 = vmul.f32 %v28, %v80
  %v97 = vmul.f32 %v29, %v80
  %v98 = vmul.f32 %v30, %v80
  %v99 = vmul.f32 %v31, %v80
  %v100 = vmul.f32 %v32, %v80
  %v101 = vmul.f32 %v33, %v80
  %v102 = vmul.f32 %v34, %v80
  %v103 = vmul.f32 %v35, %v80
  %v104 = vmul.f32 %v36, %v80
  %v105 = vmul.f32 %v37, %v80
  %v106 = vmul.f32 %v38, %v80
  %v107 = vmul.f32 %v39, %v80
  %v108 = vmul.f32 %v40, %v80
  %v109 = vmul.f32 %v41, %v80
  %v110 = vmul.f32 %v42, %v80
  %v111 = vmul.f32 %v43, %v80
  %v112 = vmul.f32 %v44, %v80
  %v113 = vmul.f32 %v45, %v80
  %v114 = vmul.f32 %v46, %v80
  %v115 = vmul.f32 %v47, %v80
  %v116 = vmul.f32 %v48, %v80
  %v117 = vmul.f32 %v49, %v80
  %v118 = vmul.f32 %v50, %v80
  %v119 = vmul.f32 %v51, %v80
  %v120 = vmul.f32 %v52, %v80
  %v121 = vmul.f32 %v53, %v80
  %v122 = vmul.f32 %v54, %v80
  %v123 = vmul.f32 %v55, %v80
  %v124 = vmul.f32 %v56, %v80
  %v125 = vmul.f32 %v57, %v80
  %v126 = vmul.f32 %v58, %v80
  %v127 = vmul.f32 %v59, %v80
  %v128 = vmul.f32 %v60, %v80
  %v129 = vmul.f32 %v61, %v80
  %v130 = vmul.f32 %v62, %v80
  %v131 = vmul.f32 %v63, %v80
  %v132 = vmul.f32 %v64, %v80
  %v133 = vmul.f32 %v65, %v80
  %v134 = vmul.f32 %v66, %v80
  %v135 = vmul.f32 %v67, %v80
  %v136 = vmul.f32 %v68, %v80
  %v137 = vmul.f32 %v69, %v80
  %v138 = vmul.f32 %v70, %v80
  %v139 = vmul.f32 %v71, %v80
  %v140 = vmul.f32 %v72, %v80
  %v141 = vmul.f32 %v73, %v80
  %v142 = vmul.f32 %v74, %v80
  %v143 = vmul.f32 %v75, %v80
  %v144 = vmul.f32 %v76, %v80
  %v145 = vmul.f32 %v77, %v80
  %v146 = vld [vmem:[%s2] sm:$0x1]
  %v148 = vperm.slane %v146, 0
  %v150 = vadd.f32 %v82, %v148
  %v151 = vadd.f32 %v83, %v148
  %v152 = vadd.f32 %v84, %v148
  %v153 = vadd.f32 %v85, %v148
  %v154 = vadd.f32 %v86, %v148
  %v155 = vadd.f32 %v87, %v148
  %v156 = vadd.f32 %v88, %v148
  %v157 = vadd.f32 %v89, %v148
  %v158 = vadd.f32 %v90, %v148
  %v159 = vadd.f32 %v91, %v148
  %v160 = vadd.f32 %v92, %v148
  %v161 = vadd.f32 %v93, %v148
  %v162 = vadd.f32 %v94, %v148
  %v163 = vadd.f32 %v95, %v148
  %v164 = vadd.f32 %v96, %v148
  %v165 = vadd.f32 %v97, %v148
  %v166 = vadd.f32 %v98, %v148
  %v167 = vadd.f32 %v99, %v148
  %v168 = vadd.f32 %v100, %v148
  %v169 = vadd.f32 %v101, %v148
  %v170 = vadd.f32 %v102, %v148
  %v171 = vadd.f32 %v103, %v148
  %v172 = vadd.f32 %v104, %v148
  %v173 = vadd.f32 %v105, %v148
  %v174 = vadd.f32 %v106, %v148
  %v175 = vadd.f32 %v107, %v148
  %v176 = vadd.f32 %v108, %v148
  %v177 = vadd.f32 %v109, %v148
  %v178 = vadd.f32 %v110, %v148
  %v179 = vadd.f32 %v111, %v148
  %v180 = vadd.f32 %v112, %v148
  %v181 = vadd.f32 %v113, %v148
  %v182 = vadd.f32 %v114, %v148
  %v183 = vadd.f32 %v115, %v148
  %v184 = vadd.f32 %v116, %v148
  %v185 = vadd.f32 %v117, %v148
  %v186 = vadd.f32 %v118, %v148
  %v187 = vadd.f32 %v119, %v148
  %v188 = vadd.f32 %v120, %v148
  %v189 = vadd.f32 %v121, %v148
  %v190 = vadd.f32 %v122, %v148
  %v191 = vadd.f32 %v123, %v148
  %v192 = vadd.f32 %v124, %v148
  %v193 = vadd.f32 %v125, %v148
  %v194 = vadd.f32 %v126, %v148
  %v195 = vadd.f32 %v127, %v148
  %v196 = vadd.f32 %v128, %v148
  %v197 = vadd.f32 %v129, %v148
  %v198 = vadd.f32 %v130, %v148
  %v199 = vadd.f32 %v131, %v148
  %v200 = vadd.f32 %v132, %v148
  %v201 = vadd.f32 %v133, %v148
  %v202 = vadd.f32 %v134, %v148
  %v203 = vadd.f32 %v135, %v148
  %v204 = vadd.f32 %v136, %v148
  %v205 = vadd.f32 %v137, %v148
  %v206 = vadd.f32 %v138, %v148
  %v207 = vadd.f32 %v139, %v148
  %v208 = vadd.f32 %v140, %v148
  %v209 = vadd.f32 %v141, %v148
  %v210 = vadd.f32 %v142, %v148
  %v211 = vadd.f32 %v143, %v148
  %v212 = vadd.f32 %v144, %v148
  %v213 = vadd.f32 %v145, %v148
  %v214 = vmax.f32 %v150, 0.0
  %v215 = vmax.f32 %v151, 0.0
  %v216 = vmax.f32 %v152, 0.0
  %v217 = vmax.f32 %v153, 0.0
  %v218 = vmax.f32 %v154, 0.0
  %v219 = vmax.f32 %v155, 0.0
  %v220 = vmax.f32 %v156, 0.0
  %v221 = vmax.f32 %v157, 0.0
  %v222 = vmax.f32 %v158, 0.0
  %v223 = vmax.f32 %v159, 0.0
  %v224 = vmax.f32 %v160, 0.0
  %v225 = vmax.f32 %v161, 0.0
  %v226 = vmax.f32 %v162, 0.0
  %v227 = vmax.f32 %v163, 0.0
  %v228 = vmax.f32 %v164, 0.0
  %v229 = vmax.f32 %v165, 0.0
  %v230 = vmax.f32 %v166, 0.0
  %v231 = vmax.f32 %v167, 0.0
  %v232 = vmax.f32 %v168, 0.0
  %v233 = vmax.f32 %v169, 0.0
  %v234 = vmax.f32 %v170, 0.0
  %v235 = vmax.f32 %v171, 0.0
  %v236 = vmax.f32 %v172, 0.0
  %v237 = vmax.f32 %v173, 0.0
  %v238 = vmax.f32 %v174, 0.0
  %v239 = vmax.f32 %v175, 0.0
  %v240 = vmax.f32 %v176, 0.0
  %v241 = vmax.f32 %v177, 0.0
  %v242 = vmax.f32 %v178, 0.0
  %v243 = vmax.f32 %v179, 0.0
  %v244 = vmax.f32 %v180, 0.0
  %v245 = vmax.f32 %v181, 0.0
  %v246 = vmax.f32 %v182, 0.0
  %v247 = vmax.f32 %v183, 0.0
  %v248 = vmax.f32 %v184, 0.0
  %v249 = vmax.f32 %v185, 0.0
  %v250 = vmax.f32 %v186, 0.0
  %v251 = vmax.f32 %v187, 0.0
  %v252 = vmax.f32 %v188, 0.0
  %v253 = vmax.f32 %v189, 0.0
  %v254 = vmax.f32 %v190, 0.0
  %v255 = vmax.f32 %v191, 0.0
  %v256 = vmax.f32 %v192, 0.0
  %v257 = vmax.f32 %v193, 0.0
  %v258 = vmax.f32 %v194, 0.0
  %v259 = vmax.f32 %v195, 0.0
  %v260 = vmax.f32 %v196, 0.0
  %v261 = vmax.f32 %v197, 0.0
  %v262 = vmax.f32 %v198, 0.0
  %v263 = vmax.f32 %v199, 0.0
  %v264 = vmax.f32 %v200, 0.0
  %v265 = vmax.f32 %v201, 0.0
  %v266 = vmax.f32 %v202, 0.0
  %v267 = vmax.f32 %v203, 0.0
  %v268 = vmax.f32 %v204, 0.0
  %v269 = vmax.f32 %v205, 0.0
  %v270 = vmax.f32 %v206, 0.0
  %v271 = vmax.f32 %v207, 0.0
  %v272 = vmax.f32 %v208, 0.0
  %v273 = vmax.f32 %v209, 0.0
  %v274 = vmax.f32 %v210, 0.0
  %v275 = vmax.f32 %v211, 0.0
  %v276 = vmax.f32 %v212, 0.0
  %v277 = vmax.f32 %v213, 0.0
  %278 = vst [vmem:[%s3] sm:$0xff] %v214
  %279 = vst [vmem:[%s3 + $0x8] sm:$0xff] %v215
  %280 = vst [vmem:[%s3 + $0x10] sm:$0xff] %v216
  %281 = vst [vmem:[%s3 + $0x18] sm:$0xff] %v217
  %282 = vst [vmem:[%s3 + $0x20] sm:$0xff] %v218
  %283 = vst [vmem:[%s3 + $0x28] sm:$0xff] %v219
  %284 = vst [vmem:[%s3 + $0x30] sm:$0xff] %v220
  %285 = vst [vmem:[%s3 + $0x38] sm:$0xff] %v221
  %286 = vst [vmem:[%s3 + $0x40] sm:$0xff] %v222
  %287 = vst [vmem:[%s3 + $0x48] sm:$0xff] %v223
  %288 = vst [vmem:[%s3 + $0x50] sm:$0xff] %v224
  %289 = vst [vmem:[%s3 + $0x58] sm:$0xff] %v225
  %290 = vst [vmem:[%s3 + $0x60] sm:$0xff] %v226
  %291 = vst [vmem:[%s3 + $0x68] sm:$0xff] %v227
  %292 = vst [vmem:[%s3 + $0x70] sm:$0xff] %v228
  %293 = vst [vmem:[%s3 + $0x78] sm:$0xff] %v229
  %294 = vst [vmem:[%s3 + $0x80] sm:$0xff] %v230
  %295 = vst [vmem:[%s3 + $0x88] sm:$0xff] %v231
  %296 = vst [vmem:[%s3 + $0x90] sm:$0xff] %v232
  %297 = vst [vmem:[%s3 + $0x98] sm:$0xff] %v233
  %298 = vst [vmem:[%s3 + $0xa0] sm:$0xff] %v234
  %299 = vst [vmem:[%s3 + $0xa8] sm:$0xff] %v235
  %300 = vst [vmem:[%s3 + $0xb0] sm:$0xff] %v236
  %301 = vst [vmem:[%s3 + $0xb8] sm:$0xff] %v237
  %302 = vst [vmem:[%s3 + $0xc0] sm:$0xff] %v238
  %303 = vst [vmem:[%s3 + $0xc8] sm:$0xff] %v239
  %304 = vst [vmem:[%s3 + $0xd0] sm:$0xff] %v240
  %305 = vst [vmem:[%s3 + $0xd8] sm:$0xff] %v241
  %306 = vst [vmem:[%s3 + $0xe0] sm:$0xff] %v242
  %307 = vst [vmem:[%s3 + $0xe8] sm:$0xff] %v243
  %308 = vst [vmem:[%s3 + $0xf0] sm:$0xff] %v244
  %309 = vst [vmem:[%s3 + $0xf8] sm:$0xff] %v245
  %310 = vst [vmem:[%s3 + $0x100] sm:$0xff] %v246
  %311 = vst [vmem:[%s3 + $0x108] sm:$0xff] %v247
  %312 = vst [vmem:[%s3 + $0x110] sm:$0xff] %v248
  %313 = vst [vmem:[%s3 + $0x118] sm:$0xff] %v249
  %314 = vst [vmem:[%s3 + $0x120] sm:$0xff] %v250
  %315 = vst [vmem:[%s3 + $0x128] sm:$0xff] %v251
  %316 = vst [vmem:[%s3 + $0x130] sm:$0xff] %v252
  %317 = vst [vmem:[%s3 + $0x138] sm:$0xff] %v253
  %318 = vst [vmem:[%s3 + $0x140] sm:$0xff] %v254
  %319 = vst [vmem:[%s3 + $0x148] sm:$0xff] %v255
  %320 = vst [vmem:[%s3 + $0x150] sm:$0xff] %v256
  %321 = vst [vmem:[%s3 + $0x158] sm:$0xff] %v257
  %322 = vst [vmem:[%s3 + $0x160] sm:$0xff] %v258
  %323 = vst [vmem:[%s3 + $0x168] sm:$0xff] %v259
  %324 = vst [vmem:[%s3 + $0x170] sm:$0xff] %v260
  %325 = vst [vmem:[%s3 + $0x178] sm:$0xff] %v261
  %326 = vst [vmem:[%s3 + $0x180] sm:$0xff] %v262
  %327 = vst [vmem:[%s3 + $0x188] sm:$0xff] %v263
  %328 = vst [vmem:[%s3 + $0x190] sm:$0xff] %v264
  %329 = vst [vmem:[%s3 + $0x198] sm:$0xff] %v265
  %330 = vst [vmem:[%s3 + $0x1a0] sm:$0xff] %v266
  %331 = vst [vmem:[%s3 + $0x1a8] sm:$0xff] %v267
  %332 = vst [vmem:[%s3 + $0x1b0] sm:$0xff] %v268
  %333 = vst [vmem:[%s3 + $0x1b8] sm:$0xff] %v269
  %334 = vst [vmem:[%s3 + $0x1c0] sm:$0xff] %v270
  %335 = vst [vmem:[%s3 + $0x1c8] sm:$0xff] %v271
  %336 = vst [vmem:[%s3 + $0x1d0] sm:$0xff] %v272
  %337 = vst [vmem:[%s3 + $0x1d8] sm:$0xff] %v273
  %338 = vst [vmem:[%s3 + $0x1e0] sm:$0xff] %v274
  %339 = vst [vmem:[%s3 + $0x1e8] sm:$0xff] %v275
  %340 = vst [vmem:[%s3 + $0x1f0] sm:$0xff] %v276
  %341 = vst [vmem:[%s3 + $0x1f8] sm:$0xff] %v277
  // Predicated region
  $region14: #{up_forward.7} parent=0 // pred_check
    _
  $region15: #{up_forward.7} parent=0 // pred_check_branch
    %343 = sbr.rel (0) target = $region17
  $region16: #{up_forward.7} parent=0 // pred_region
    _
  $region17: #{up_forward.7} parent=0 // pred_fallthru
    _
  // Predicated region
  $region18: #{up_forward.7} parent=0 // pred_check
    _
  $region19: #{up_forward.7} parent=0 // pred_check_branch
    %345 = sbr.rel (0) target = $region21
  $region20: #{up_forward.7} parent=0 // pred_region
    _
  $region21: #{up_forward.7} parent=0 // pred_fallthru
    _

</llo_original>
